<compile_context>
chip_gen: v7x
topology: tpu7x:2x2x1
jax: 0.10.0
libtpu: 0.0.40
codegen_flags: <defaults>
</compile_context>

<pallas_src>
import functools

import jax
import jax.numpy as jnp
from jax import lax
from jax.experimental import pallas as pl
from jax.experimental.pallas import tpu as pltpu


# ---------------------------------------------------------------------------
# jacobi ('vector' type) contrastive kernel
# ---------------------------------------------------------------------------

def _jacobi_kernel(feat_lhs_ref, feat_rhs_ref, pos_ref, jmask_ref, out_ref,
                   *, no_abs, b_real, tm, exp_dtype):
    """One (tm, B) row-block of the contrastive loss.

    feat_lhs_ref : (tm, F) bf16  pre-normalized rows (padded rows are zero)
    feat_rhs_ref : (B,  F) bf16  pre-normalized rows (resident across steps)
    pos_ref      : (tm, B) int8  positive-pair mask
    jmask_ref    : (tm, 1) f32   per-ray mask (padded rows are zero)
    out_ref      : (2,)    f32   SMEM accumulator:
                   [0] sum_i jmask_i * log(pos_sim_i / row_sum_i + 1e-7)
                   [1] sum_i log(pos_sim_i + 0.1)   (normal_gather variant)
    """
    i = pl.program_id(0)

    @pl.when(i == 0)
    def _init():
        out_ref[0] = 0.0
        out_ref[1] = 0.0

    # Gram block on the MXU, contracting the last dim of BOTH operands (no
    # explicit transpose).  Inputs are already normalized -> this IS the cosine.
    mi_arg = lax.dot_general(
        feat_lhs_ref[...], feat_rhs_ref[...],
        dimension_numbers=(((1,), (1,)), ((), ())),
        preferred_element_type=jnp.float32)                      # (tm, B) f32
    if not no_abs:                                               # static branch
        mi_arg = jnp.abs(mi_arg)

    # exp on the EUP; bf16 on v6e/v7x (bf16 EUP), f32 on v5e.  |mi_arg| <= 1.
    mi = jnp.exp(mi_arg.astype(exp_dtype)).astype(jnp.float32)   # (tm, B)

    # Fused positive-mask reduction: no (tm,B) f32 materialization of pos.
    pos_sim = jnp.sum(jnp.where(pos_ref[...] != 0, mi, 0.0),
                      axis=-1, keepdims=True)                    # (tm, 1)
    row_sum = jnp.sum(mi, axis=-1, keepdims=True)                # == pos + neg

    # mi > 0 everywhere => row_sum > 0 => contrastive is never NaN (matches the
    # reference, whose nansum / no_nan_count therefore reduce to sum / B).
    contrastive = jnp.log(pos_sim / row_sum + 1e-7)              # (tm, 1)
    out_ref[0] += jnp.sum(contrastive * jmask_ref[...])

    # normal_gather numerator; only count real (non-padded) rows.
    row_ids = i * tm + lax.broadcasted_iota(jnp.int32, (tm, 1), 0)
    gather = jnp.where(row_ids < b_real, jnp.log(pos_sim + 0.1), 0.0)
    out_ref[1] += jnp.sum(gather)


# ---------------------------------------------------------------------------
# pallas_call wrapper
# ---------------------------------------------------------------------------

def _choose_row_tile(b):
    """Row tile so each (tm, B) f32 temporary stays ~<= 4 MiB (fits the scoped
    VMEM budget on v5e/v6e/v7x together with the explicit limit below)."""
    tm = 512
    while tm > 128 and tm * b > (1 << 20):
        tm //= 2
    # never wider than the 128-padded batch itself
    return min(tm, ((b + 127) // 128) * 128)


def _bf16_eup_available():
    # bf16 EUP exists on v6e / v7x; v5e and older keep f32 (perf review).
    try:
        kind = jax.devices()[0].device_kind.lower()
    except Exception:
        return False
    return ("v6" in kind) or ("v7" in kind)


def jacobi_vector_stats(feat2d, pos_condition, jaco_mask, *, no_abs=False,
                        row_tile=None, exp_dtype=None):
    """Pallas-accelerated core of NeuSLoss.jacobi_loss (jacobi_type='vector').

    Returns (jacobi_gradient_loss, mi_contrastive_loss, gather_loss); the last
    one is nanmean(log(pos_sim + 0.1)) used when normal_gather=True.
    """
    b, f = feat2d.shape
    feat2d = feat2d.astype(jnp.float32)

    # O(B*F) prep fused by XLA: row norms (gradient loss) and normalized bf16
    # features for the Gram matrix.  Normalizing once here avoids re-normalizing
    # the resident RHS block on every grid step inside the kernel.
    norm_sq = jnp.sum(feat2d * feat2d, axis=-1, keepdims=True)            # (B,1)
    feat_norm = jnp.sqrt(norm_sq)
    grad_loss = jnp.mean((feat_norm - 1.0) ** 2)
    # eps placement differs from the reference's "+1e-7 on norm_i*norm_j" by
    # O(eps / norm^2); only matters for near-zero feature vectors.
    feat_hat = (feat2d * lax.rsqrt(norm_sq + 1e-12)).astype(jnp.bfloat16)  # (B,F)

    tm = int(row_tile) if row_tile is not None else _choose_row_tile(b)
    b_pad = ((b + tm - 1) // tm) * tm
    nt = b_pad // tm
    pad = b_pad - b

    # NOTE: jacobi_pos_threshold is unused, matching the reference forward
    # (jaco_info is consumed directly as a boolean mask there as well).
    pos_i8 = (pos_condition != 0).astype(jnp.int8)                         # (B,B)
    jmask = jaco_mask.reshape(b, 1).astype(jnp.float32)                    # (B,1)
    feat_lhs = feat_hat
    if pad:
        # padded rows: feat=0 -> exp(0)=1, pos=0 -> pos_sim=0, jmask=0 -> no
        # contribution to either accumulated sum (gather term masked by row id).
        feat_lhs = jnp.pad(feat_hat, ((0, pad), (0, 0)))
        pos_i8 = jnp.pad(pos_i8, ((0, pad), (0, 0)))
        jmask = jnp.pad(jmask, ((0, pad), (0, 0)))

    if exp_dtype is None:
        exp_dtype = jnp.bfloat16 if _bf16_eup_available() else jnp.float32

    kernel = functools.partial(_jacobi_kernel, no_abs=bool(no_abs),
                               b_real=b, tm=tm, exp_dtype=exp_dtype)
    cost = pl.CostEstimate(
        flops=2 * b_pad * b * f + 8 * b_pad * b + 16 * b_pad,
        transcendentals=b_pad * b + 3 * b_pad,
        bytes_accessed=(feat_lhs.size * 2 + feat_hat.size * 2
                        + pos_i8.size + jmask.size * 4 + 8),
    )

    sums = pl.pallas_call(
        kernel,
        grid=(nt,),
        in_specs=[
            pl.BlockSpec((tm, f), lambda i: (i, 0)),      # normalized LHS rows
            pl.BlockSpec((b, f), lambda i: (0, 0)),       # normalized RHS (resident)
            pl.BlockSpec((tm, b), lambda i: (i, 0)),      # int8 positive mask
            # TODO(synk): per perf review this could be lane-dense (1,B); at a
            # few KiB per step it is immaterial once the block is row-tiled.
            pl.BlockSpec((tm, 1), lambda i: (i, 0)),      # per-ray jaco mask
        ],
        out_specs=pl.BlockSpec((2,), lambda i: (0,),
                               memory_space=pltpu.MemorySpace.SMEM),
        out_shape=jax.ShapeDtypeStruct((2,), jnp.float32),
        compiler_params=pltpu.CompilerParams(
            # Accumulating resident output -> the row-tile axis is a reduction.
            # TODO(synk): on v7x split row-tile groups over the 2 TensorCores
            # (per-tile partial outputs + a "parallel" axis).
            dimension_semantics=("arbitrary",),
            vmem_limit_bytes=40 * 1024 * 1024,
        ),
        cost_estimate=cost,
    )(feat_lhs, feat_hat, pos_i8, jmask)
    # TODO(synk): on v5e consider pipeline_mode=pl.Buffered(3) on the pos spec
    # if its int8 DMA is still exposed behind the exp/VPU compute.

    contrastive_loss = -sums[0] / float(b)   # no_nan_count == B (never NaN)
    gather_loss = sums[1] / float(b)         # nanmean == mean (never NaN)
    return grad_loss, contrastive_loss, gather_loss


# ---------------------------------------------------------------------------
# module
# ---------------------------------------------------------------------------

class NeuSLossPallas:
    """JAX/Pallas re-implementation of NeuSLoss.forward.

    The O(B^2) jacobi contrastive block runs in a Pallas TPU kernel; the O(B)
    color / PSNR / BCE terms are plain jnp so XLA fuses them with producers.
    """

    def __init__(self, conf):
        self.color_weight = conf['color_weight']
        self.igr_weight = conf['igr_weight']
        self.smooth_weight = conf['smooth_weight']
        self.mask_weight = conf['mask_weight']
        self.depth_weight = conf['depth_weight']
        self.normal_weight = conf['normal_weight']
        self.normal_consistency_weight = conf['normal_consistency_weight']
        self.plane_offset_weight = conf['plane_offset_weight']
        self.manhattan_constrain_weight = conf['manhattan_constrain_weight']
        self.plane_loss_milestone = conf['plane_loss_milestone']
        self.warm_up_start = conf['warm_up_start']
        self.warm_up_end = conf['warm_up_end']
        self.jacobi_contrastive_weight = conf['jacobi_contrastive_weight']
        self.jacobi_gradient_weight = conf['jacobi_gradient_weight']
        self.jacobi_pos_threshold = conf['jacobi_pos_threshold']
        self.jacobi_start = conf['jacobi_start']
        self.jacobi_end = conf['jacobi_end']
        self.jacobi_type = conf.get('jacobi_type', 'vector')
        self.no_abs = conf.get('no_abs', False)
        self.normal_gather = conf.get('normal_gather', False)
        self.iter_step = 0
        self.iter_end = -1

    def get_warm_up_ratio(self):
        if self.warm_up_end == 0.0:
            return 1.0
        elif self.iter_step < self.warm_up_start:
            return 0.0
        else:
            return min(1.0, (self.iter_step - self.warm_up_start) /
                       (self.warm_up_end - self.warm_up_start))

    def forward(self, input_model, render_out, sdf_network_fine=None,
                patchmatch_out=None):
        true_rgb = input_model['true_rgb'].astype(jnp.float32)
        mask = input_model['mask'].astype(jnp.float32)
        rays_o = input_model['rays_o']
        batch_size = rays_o.shape[0]

        color_fine = render_out['color_fine'].astype(jnp.float32)
        weight_sum = render_out['weight_sum'].astype(jnp.float32)
        variance = render_out['variance']
        gradient_error_fine = render_out['gradient_error_fine']
        feature = render_out['feature']

        # --- color / PSNR / background: O(B), launch-bound -> plain jnp -------
        mask_sum = jnp.sum(mask) + 1e-5
        diff = color_fine - true_rgb
        color_fine_loss = jnp.sum(jnp.abs(diff * mask)) / mask_sum
        psnr = 20.0 * jnp.log10(
            1.0 / jnp.sqrt(jnp.sum(diff * diff * mask) / (mask_sum * 3.0)))
        p = jnp.clip(weight_sum, 0.001, 1.0 - 0.001)
        background_loss = jnp.mean(
            -(mask * jnp.log(p) + (1.0 - mask) * jnp.log(1.0 - p)))

        gradient_error_loss = 0.0
        if self.igr_weight > 0:
            gradient_error_loss = gradient_error_fine

        # TODO(synk): smooth_weight branch needs sdf_network_fine.gradient (external SDF net).
        surf_reg_loss = 0.0
        # TODO(synk): normal_weight branch needs TrainingUtils.get_angular_error (not provided).
        normals_fine_loss = 0.0
        depths_fine_loss = 0.0  # pts_target is None in the reference forward
        # TODO(synk): plane consistency / offset / manhattan losses use data-dependent
        # python loops over plane ids - not translated (their weights are 0 here).
        plane_loss_all = 0.0

        jacobi_loss = 0.0
        jacobi_gradient_loss = 0.0
        jacobi_contrastive_loss = 0.0
        jacobi_active = ((self.jacobi_contrastive_weight > 0 or
                          self.jacobi_gradient_weight > 0) and
                         (self.jacobi_start <= self.iter_step < self.jacobi_end))
        if jacobi_active:
            if self.jacobi_type != 'vector':
                # TODO(synk): jacobi_type='space' (torch_space_differ) not implemented.
                raise NotImplementedError(f"jacobi_type={self.jacobi_type!r}")
            feat2d = feature.reshape(feature.shape[0], -1)
            grad_raw, contrastive_raw, gather_raw = jacobi_vector_stats(
                feat2d, input_model['jaco_info'], input_model['jaco_mask'],
                no_abs=self.no_abs)
            second_term = gather_raw if self.normal_gather else contrastive_raw
            jacobi_gradient_loss = self.jacobi_gradient_weight * grad_raw
            jacobi_contrastive_loss = self.jacobi_contrastive_weight * second_term
            jacobi_loss = jacobi_contrastive_loss + jacobi_gradient_loss

        warm_up = self.get_warm_up_ratio()
        loss = (color_fine_loss * self.color_weight
                + gradient_error_loss * self.igr_weight
                + surf_reg_loss * self.smooth_weight
                + plane_loss_all
                + background_loss * self.mask_weight
                + normals_fine_loss * self.normal_weight * warm_up
                + depths_fine_loss * self.depth_weight
                + jacobi_loss)

        logs_summary = {
            'Loss/loss': loss,
            'Loss/loss_color': color_fine_loss,
            'Loss/loss_bg': background_loss,
            'Loss/loss_eik': gradient_error_loss,
            'Loss/loss_smooth': surf_reg_loss,
            'Loss/variance': jnp.mean(variance),
            'Log/psnr': psnr,
            'Log/ratio_warmup_loss': warm_up,
            'Loss/jacobi_loss': jacobi_loss,
            'Log/jacobi_contrastive_loss': jacobi_contrastive_loss,
            'Log/jacobi_gradient_loss': jacobi_gradient_loss,
            'Loss/final_normal': normals_fine_loss * self.normal_weight * warm_up,
            'Loss/final_eikonal': gradient_error_loss * self.igr_weight,
        }
        mask_keep_gt_normal = jnp.ones((batch_size,), jnp.float32)
        return loss, logs_summary, mask_keep_gt_normal


# ---------------------------------------------------------------------------
# pure-jnp reference of the jacobi loss (torch-parity), for validation
# ---------------------------------------------------------------------------

def _jacobi_reference_jnp(feat2d, pos_bool, jaco_mask, *, no_abs=False):
    feat2d = feat2d.astype(jnp.float32)
    fd = feat2d @ feat2d.T
    fn = jnp.sqrt(jnp.sum(feat2d * feat2d, axis=-1))
    arg = fd / (fn * fn[:, None] + 1e-7)
    if not no_abs:
        arg = jnp.abs(arg)
    mi = jnp.exp(arg)
    posf = (pos_bool != 0).astype(jnp.float32)
    pos_sim = jnp.sum(posf * mi, axis=-1)
    neg_sim = jnp.sum((1.0 - posf) * mi, axis=-1)
    contrastive = jnp.log(pos_sim / (pos_sim + neg_sim) + 1e-7)
    grad = jnp.mean((fn - 1.0) ** 2)
    cnt = jnp.sum(~jnp.isnan(contrastive))
    closs = -jnp.nansum(contrastive * jaco_mask.reshape(-1)) / cnt
    return grad, closs


if __name__ == "__main__":
    key = jax.random.PRNGKey(0)
    ks = jax.random.split(key, 12)

    B = 256              # rays per batch (small; 128-lane multiple)
    F_SUB, F_CH = 4, 8   # render feature -> flattened to F = 32

    true_rgb = jax.random.uniform(ks[0], (B, 3), jnp.float32)
    color_fine = jax.random.uniform(ks[1], (B, 3), jnp.float32)
    mask = (jax.random.uniform(ks[2], (B, 1)) > 0.3).astype(jnp.float32)
    rays_o = jax.random.normal(ks[3], (B, 3), jnp.float32)
    rays_d = jax.random.normal(ks[4], (B, 3), jnp.float32)
    near = jnp.zeros((B, 1), jnp.float32)
    far = jnp.ones((B, 1), jnp.float32) * 4.0

    weight_sum = jax.nn.sigmoid(jax.random.normal(ks[5], (B, 1), jnp.float32))
    variance = jax.random.uniform(ks[6], (B, 1), jnp.float32) * 0.1
    depth = jax.random.uniform(ks[7], (B, 1), jnp.float32) * 3.0
    feature = jax.random.normal(ks[8], (B, F_SUB, F_CH), jnp.float32)
    gradient_error_fine = jnp.abs(jax.random.normal(ks[9], (), jnp.float32))

    jaco_info = jax.random.uniform(ks[10], (B, B)) > 0.5     # bool positives
    jaco_mask = (jax.random.uniform(ks[11], (B, 1)) > 0.1).astype(jnp.float32)

    # --- direct kernel check (forces 2 grid steps) against pure-jnp reference ---
    feat2d = feature.reshape(B, -1)
    grad_k, con_k, _ = jacobi_vector_stats(feat2d, jaco_info, jaco_mask,
                                           no_abs=False, row_tile=128)
    grad_r, con_r = _jacobi_reference_jnp(feat2d, jaco_info, jaco_mask, no_abs=False)
    grad_k, con_k = float(jax.block_until_ready(grad_k)), float(con_k)
    grad_r, con_r = float(grad_r), float(con_r)
    assert abs(grad_k - grad_r) <= 1e-4 * (abs(grad_r) + 1e-6), (grad_k, grad_r)
    assert abs(con_k - con_r) <= 0.05 * abs(con_r) + 0.02, (con_k, con_r)

    # --- full forward pass ---
    conf = {
        'color_weight': 1.0, 'igr_weight': 0.1, 'smooth_weight': 0.0,
        'mask_weight': 0.1, 'depth_weight': 0.0, 'normal_weight': 0.0,
        'normal_consistency_weight': 0.0, 'plane_offset_weight': 0.0,
        'manhattan_constrain_weight': 0.0, 'plane_loss_milestone': 10 ** 6,
        'warm_up_start': 0, 'warm_up_end': 0.0,
        'jacobi_contrastive_weight': 0.01, 'jacobi_gradient_weight': 0.1,
        'jacobi_pos_threshold': 0.5, 'jacobi_start': 0, 'jacobi_end': 10 ** 9,
        'jacobi_type': 'vector', 'no_abs': False, 'normal_gather': False,
    }
    input_model = {
        'true_rgb': true_rgb, 'mask': mask, 'rays_o': rays_o, 'rays_d': rays_d,
        'near': near, 'far': far, 'jaco_info': jaco_info, 'jaco_mask': jaco_mask,
    }
    render_out = {
        'color_fine': color_fine, 'variance': variance, 'cdf_fine': None,
        'gradient_error_fine': gradient_error_fine, 'weight_max': None,
        'weight_sum': weight_sum, 'weights': None, 'depth': depth,
        'feature': feature, 'normal': None,
    }

    loss_mod = NeuSLossPallas(conf)
    loss, logs, mask_keep = loss_mod.forward(input_model, render_out)
    loss = jax.block_until_ready(loss)

    assert bool(jnp.isfinite(loss)), f"non-finite loss: {loss}"
    print("KERNEL_OK")
</pallas_src>

<mosaic_0001>
module attributes {stable_mosaic.version = 11 : i64} {
  func.func @_jacobi_kernel(%arg0: i32, %arg1: memref<128x32xbf16, #tpu.memory_space<vmem>>, %arg2: memref<256x32xbf16, #tpu.memory_space<vmem>>, %arg3: memref<128x256xi8, #tpu.memory_space<vmem>>, %arg4: memref<128x1xf32, #tpu.memory_space<vmem>>, %arg5: memref<2xf32, #tpu.memory_space<smem>>) attributes {dimension_semantics = [#tpu.dimension_semantics<arbitrary>], iteration_bounds = array<i64: 2>, scalar_prefetch = 0 : i64, scratch_operands = 0 : i64, tpu.core_type = #tpu.core_type<tc>, window_params = [{transform_indices = @transform_0, window_bounds = array<i64: 128, 32>}, {pipeline_mode = #tpu.pipeline_mode<synchronous>, transform_indices = @transform_1, window_bounds = array<i64: 256, 32>}, {transform_indices = @transform_2, window_bounds = array<i64: 128, 256>}, {transform_indices = @transform_3, window_bounds = array<i64: 128, 1>}, {transform_indices = @transform_4, window_bounds = array<i64: 2>}]} {
    %c0_i32 = arith.constant 0 : i32
    %0 = arith.cmpi eq, %arg0, %c0_i32 : i32
    %1 = arith.extui %0 : i1 to i32
    %c0_i32_0 = arith.constant 0 : i32
    %2 = arith.cmpi ne, %1, %c0_i32_0 : i32
    scf.if %2 {
      %cst_19 = arith.constant 0.000000e+00 : f32
      %c0_20 = arith.constant 0 : index
      %48 = memref.load %arg5[%c0_20] : memref<2xf32, #tpu.memory_space<smem>>
      memref.store %cst_19, %arg5[%c0_20] : memref<2xf32, #tpu.memory_space<smem>>
      %cst_21 = arith.constant 0.000000e+00 : f32
      %c1_22 = arith.constant 1 : index
      %49 = memref.load %arg5[%c1_22] : memref<2xf32, #tpu.memory_space<smem>>
      memref.store %cst_21, %arg5[%c1_22] : memref<2xf32, #tpu.memory_space<smem>>
    } else {
    }
    %c0 = arith.constant 0 : index
    %c0_1 = arith.constant 0 : index
    %3 = vector.load %arg1[%c0, %c0_1] : memref<128x32xbf16, #tpu.memory_space<vmem>>, vector<128x32xbf16>
    %c0_2 = arith.constant 0 : index
    %c0_3 = arith.constant 0 : index
    %4 = vector.load %arg2[%c0_2, %c0_3] : memref<256x32xbf16, #tpu.memory_space<vmem>>, vector<256x32xbf16>
    %cst = arith.constant dense<0.000000e+00> : vector<128x256xf32>
    %5 = tpu.matmul %3, %4, %cst {dimension_numbers = #tpu.dot_dimension_numbers<[1], [1], [0], [0], [0, 0, 1, 0], [], []>} : vector<128x32xbf16>, vector<256x32xbf16>, vector<128x256xf32> -> vector<128x256xf32>
    %6 = math.absf %5 : vector<128x256xf32>
    %7 = math.exp %6 : vector<128x256xf32>
    %c0_4 = arith.constant 0 : index
    %c0_5 = arith.constant 0 : index
    %8 = vector.load %arg3[%c0_4, %c0_5] : memref<128x256xi8, #tpu.memory_space<vmem>>, vector<128x256xi8>
    %c0_i8 = arith.constant 0 : i8
    %9 = vector.broadcast %c0_i8 : i8 to vector<128x256xi8>
    %10 = arith.cmpi ne, %8, %9 : vector<128x256xi8>
    %cst_6 = arith.constant 0.000000e+00 : f32
    %11 = vector.broadcast %cst_6 : f32 to vector<128x256xf32>
    %12 = arith.select %10, %7, %11 : vector<128x256xi1>, vector<128x256xf32>
    %cst_7 = arith.constant dense<0.000000e+00> : vector<128xf32>
    %13 = vector.multi_reduction <add>, %12, %cst_7 [1] : vector<128x256xf32> to vector<128xf32>
    %14 = vector.shape_cast %13 : vector<128xf32> to vector<128x1xf32>
    %cst_8 = arith.constant dense<0.000000e+00> : vector<128xf32>
    %15 = vector.multi_reduction <add>, %7, %cst_8 [1] : vector<128x256xf32> to vector<128xf32>
    %16 = vector.shape_cast %15 : vector<128xf32> to vector<128x1xf32>
    %17 = arith.divf %14, %16 : vector<128x1xf32>
    %cst_9 = arith.constant 1.000000e-07 : f32
    %18 = vector.broadcast %cst_9 : f32 to vector<128x1xf32>
    %19 = arith.addf %17, %18 : vector<128x1xf32>
    %20 = math.log %19 : vector<128x1xf32>
    %c0_10 = arith.constant 0 : index
    %21 = memref.load %arg5[%c0_10] : memref<2xf32, #tpu.memory_space<smem>>
    %c0_11 = arith.constant 0 : index
    %c0_12 = arith.constant 0 : index
    %22 = vector.load %arg4[%c0_11, %c0_12] : memref<128x1xf32, #tpu.memory_space<vmem>>, vector<128x1xf32>
    %23 = arith.mulf %20, %22 : vector<128x1xf32>
    %24 = vector.shape_cast %23 : vector<128x1xf32> to vector<1x128x1xf32>
    %cst_13 = arith.constant dense<0.000000e+00> : vector<1xf32>
    %25 = vector.multi_reduction <add>, %24, %cst_13 [1, 2] : vector<1x128x1xf32> to vector<1xf32>
    %26 = vector.shape_cast %25 : vector<1xf32> to vector<1x1x1xf32>
    %27 = vector.extract %26[0, 0, 0] : f32 from vector<1x1x1xf32>
    %28 = arith.addf %21, %27 : f32
    %c0_14 = arith.constant 0 : index
    %29 = memref.load %arg5[%c0_14] : memref<2xf32, #tpu.memory_space<smem>>
    memref.store %28, %arg5[%c0_14] : memref<2xf32, #tpu.memory_space<smem>>
    %c128_i32 = arith.constant 128 : i32
    %30 = arith.muli %arg0, %c128_i32 : i32
    %31 = tpu.iota {dimensions = array<i32: 0>} : vector<128x1xi32>
    %32 = vector.broadcast %30 : i32 to vector<128x1xi32>
    %33 = arith.addi %32, %31 : vector<128x1xi32>
    %c256_i32 = arith.constant 256 : i32
    %34 = vector.broadcast %c256_i32 : i32 to vector<128x1xi32>
    %35 = arith.cmpi slt, %33, %34 : vector<128x1xi32>
    %cst_15 = arith.constant 1.000000e-01 : f32
    %36 = vector.broadcast %cst_15 : f32 to vector<128x1xf32>
    %37 = arith.addf %14, %36 : vector<128x1xf32>
    %38 = math.log %37 : vector<128x1xf32>
    %cst_16 = arith.constant 0.000000e+00 : f32
    %39 = vector.broadcast %cst_16 : f32 to vector<128x1xf32>
    %40 = arith.select %35, %38, %39 : vector<128x1xi1>, vector<128x1xf32>
    %c1 = arith.constant 1 : index
    %41 = memref.load %arg5[%c1] : memref<2xf32, #tpu.memory_space<smem>>
    %42 = vector.shape_cast %40 : vector<128x1xf32> to vector<1x128x1xf32>
    %cst_17 = arith.constant dense<0.000000e+00> : vector<1xf32>
    %43 = vector.multi_reduction <add>, %42, %cst_17 [1, 2] : vector<1x128x1xf32> to vector<1xf32>
    %44 = vector.shape_cast %43 : vector<1xf32> to vector<1x1x1xf32>
    %45 = vector.extract %44[0, 0, 0] : f32 from vector<1x1x1xf32>
    %46 = arith.addf %41, %45 : f32
    %c1_18 = arith.constant 1 : index
    %47 = memref.load %arg5[%c1_18] : memref<2xf32, #tpu.memory_space<smem>>
    memref.store %46, %arg5[%c1_18] : memref<2xf32, #tpu.memory_space<smem>>
    return
  }
  func.func @transform_0(%arg0: i32) -> (i32, i32) {
    %c0_i32 = arith.constant 0 : i32
    %c0_i32_0 = arith.constant 0 : i32
    return %arg0, %c0_i32 : i32, i32
  }
  func.func @transform_1(%arg0: i32) -> (i32, i32) {
    %c0_i32 = arith.constant 0 : i32
    %c0_i32_0 = arith.constant 0 : i32
    %c0_i32_1 = arith.constant 0 : i32
    return %c0_i32, %c0_i32_0 : i32, i32
  }
  func.func @transform_2(%arg0: i32) -> (i32, i32) {
    %c0_i32 = arith.constant 0 : i32
    %c0_i32_0 = arith.constant 0 : i32
    return %arg0, %c0_i32 : i32, i32
  }
  func.func @transform_3(%arg0: i32) -> (i32, i32) {
    %c0_i32 = arith.constant 0 : i32
    %c0_i32_0 = arith.constant 0 : i32
    return %arg0, %c0_i32 : i32, i32
  }
  func.func @transform_4(%arg0: i32) -> i32 {
    %c0_i32 = arith.constant 0 : i32
    %c0_i32_0 = arith.constant 0 : i32
    return %c0_i32 : i32
  }
}

</mosaic_0001>

<llo_original>
// kernel: tpu_custom_call.1
$region0: #{tpu_custom_call.1}
  #allocation0 [shape = 'u32[]', space=smem, size = 0x4, offset = 0x4, fixed_abs, tag = 'smem constant byte address 0x4 - core index']
  #allocation1 [shape = 'u32[144,128]{1,0:T(1,128)}', space=vmem, size = 0x12000, scoped, tag = 'internal scratch']
  %s0 = inlined_call_operand.vmem [shape: bf16[256,32], index: 0, kind: input, shape index: {}]
  %s1 = inlined_call_operand.vmem [shape: bf16[256,32], index: 1, kind: input, shape index: {}]
  %s2 = inlined_call_operand.vmem [shape: s8[256,256], index: 2, kind: input, shape index: {}]
  %s3 = inlined_call_operand.vmem [shape: f32[256,1], index: 3, kind: input, shape index: {}]
  %s4 = inlined_call_operand.hbm [shape: f32[2], index: 4, kind: output, shape index: {}]
  %s5 = sld [smem:[#allocation0]]
  $region53: #{tpu_custom_call.1} parent=0
    _
  %s7 = ssub.s32 1, %s5
  %s8 = scalar_select 0, %s7, %s5
  $region1: #{tpu_custom_call.1} parent=0
    #allocation2 [shape = 'u8[512]{0}', space=smem, size = 0x200, scoped, tag = 'output window, operand 0, single buffered']
    #allocation3 [shape = 's32[2]{0}', space=sflag, size = 0x8, scoped, tag = 'scoped memory for tpu_custom_call.1']
    %9 = vsyncpa [#allocation3], 0
    loop: start=0, step=1, limit=4
    $region2: #{tpu_custom_call.1} parent=1 // loop_pre_header
      _
    $region3: #{tpu_custom_call.1} parent=1 // loop_header
      %s11 = sphi 0, %s15
      %p12 = scmp.ge.s32.totalorder %s11, 4
      %s21 = sphi 0, %s23
      %s24 = sphi 0, %s21
      %s25 = sphi 0, %s24
      %s41 = sphi 0, %s25
      %s45 = sphi 0, %s45
      %s47 = sphi 0, %s45
      %s48 = sphi 0, %s47
      %s62 = sphi 0, %s48
      %s68 = sphi 0, %s70
      %s71 = sphi 0, %s68
      %s72 = sphi 0, %s71
      %s88 = sphi 0, %s72
      %s94 = sphi 0, %s96
      %s97 = sphi 0, %s94
      %s98 = sphi 0, %s97
      %s114 = sphi 0, %s98
      %s118 = sphi 0, %s118
      %s120 = sphi 0, %s118
      %s121 = sphi 0, %s120
      %s135 = sphi 0, %s121
    $region4: #{tpu_custom_call.1} parent=1 // loop_header_branch
      %14 = sbr.rel (%p12) target = $region8
    $region5: #{tpu_custom_call.1} parent=1 // loop_body
      %s16 = ssub.s32 %s11, 1
      %s17 = ssub.s32 %s11, 2
      %s18 = sadd.s32 %s11, 1
      %s19 = ssub.s32 %s11, %s18
      %p20 = scmp.eq.s32.totalorder %s19, 0
      %s22 = sadd.s32 %s21, 1
      %s23 = scalar_select %p20, %s21, %s22
      %p26 = pneg %p20
      %p27 = scmp.eq.s32.totalorder %s11, 1
      %p28 = por %p26, %p27
      %p29 = scmp.ne.s32.totalorder %s21, %s24
      %p30 = scmp.eq.s32.totalorder %s11, 0
      %p31 = por %p29, %p30
      %p32 = scmp.ne.s32.totalorder %s21, %s24
      %p33 = scmp.eq.s32.totalorder %s16, 1
      %p34 = por %p32, %p33
      %p35 = scmp.ne.s32.totalorder %s24, %s25
      %p36 = scmp.eq.s32.totalorder %s16, 0
      %p37 = por %p35, %p36
      %p38 = scmp.ne.s32.totalorder %s24, %s25
      %p39 = scmp.eq.s32.totalorder %s17, 1
      %p40 = por %p38, %p39
      %p42 = scmp.ne.s32.totalorder %s25, %s41
      %p43 = scmp.eq.s32.totalorder %s17, 0
      %p44 = por %p42, %p43
      %s46 = sadd.s32 %s45, 1
      %p49 = scmp.eq.s32.totalorder %s11, 1
      %p50 = scmp.ne.s32.totalorder %s45, %s47
      %p51 = scmp.eq.s32.totalorder %s11, 0
      %p52 = por %p50, %p51
      %p53 = scmp.ne.s32.totalorder %s45, %s47
      %p54 = scmp.eq.s32.totalorder %s16, 1
      %p55 = por %p53, %p54
      %p56 = scmp.ne.s32.totalorder %s47, %s48
      %p57 = scmp.eq.s32.totalorder %s16, 0
      %p58 = por %p56, %p57
      %p59 = scmp.ne.s32.totalorder %s47, %s48
      %p60 = scmp.eq.s32.totalorder %s17, 1
      %p61 = por %p59, %p60
      %p63 = scmp.ne.s32.totalorder %s48, %s62
      %p64 = scmp.eq.s32.totalorder %s17, 0
      %p65 = por %p63, %p64
      %s66 = ssub.s32 %s11, %s18
      %p67 = scmp.eq.s32.totalorder %s66, 0
      %s69 = sadd.s32 %s68, 1
      %s70 = scalar_select %p67, %s68, %s69
      %p73 = pneg %p67
      %p74 = scmp.eq.s32.totalorder %s11, 1
      %p75 = por %p73, %p74
      %p76 = scmp.ne.s32.totalorder %s68, %s71
      %p77 = scmp.eq.s32.totalorder %s11, 0
      %p78 = por %p76, %p77
      %p79 = scmp.ne.s32.totalorder %s68, %s71
      %p80 = scmp.eq.s32.totalorder %s16, 1
      %p81 = por %p79, %p80
      %p82 = scmp.ne.s32.totalorder %s71, %s72
      %p83 = scmp.eq.s32.totalorder %s16, 0
      %p84 = por %p82, %p83
      %p85 = scmp.ne.s32.totalorder %s71, %s72
      %p86 = scmp.eq.s32.totalorder %s17, 1
      %p87 = por %p85, %p86
      %p89 = scmp.ne.s32.totalorder %s72, %s88
      %p90 = scmp.eq.s32.totalorder %s17, 0
      %p91 = por %p89, %p90
      %s92 = ssub.s32 %s11, %s18
      %p93 = scmp.eq.s32.totalorder %s92, 0
      %s95 = sadd.s32 %s94, 1
      %s96 = scalar_select %p93, %s94, %s95
      %p99 = pneg %p93
      %p100 = scmp.eq.s32.totalorder %s11, 1
      %p101 = por %p99, %p100
      %p102 = scmp.ne.s32.totalorder %s94, %s97
      %p103 = scmp.eq.s32.totalorder %s11, 0
      %p104 = por %p102, %p103
      %p105 = scmp.ne.s32.totalorder %s94, %s97
      %p106 = scmp.eq.s32.totalorder %s16, 1
      %p107 = por %p105, %p106
      %p108 = scmp.ne.s32.totalorder %s97, %s98
      %p109 = scmp.eq.s32.totalorder %s16, 0
      %p110 = por %p108, %p109
      %p111 = scmp.ne.s32.totalorder %s97, %s98
      %p112 = scmp.eq.s32.totalorder %s17, 1
      %p113 = por %p111, %p112
      %p115 = scmp.ne.s32.totalorder %s98, %s114
      %p116 = scmp.eq.s32.totalorder %s17, 0
      %p117 = por %p115, %p116
      %s119 = sadd.s32 %s118, 1
      %p122 = scmp.eq.s32.totalorder %s11, 1
      %p123 = scmp.ne.s32.totalorder %s118, %s120
      %p124 = scmp.eq.s32.totalorder %s11, 0
      %p125 = por %p123, %p124
      %p126 = scmp.ne.s32.totalorder %s118, %s120
      %p127 = scmp.eq.s32.totalorder %s16, 1
      %p128 = por %p126, %p127
      %p129 = scmp.ne.s32.totalorder %s120, %s121
      %p130 = scmp.eq.s32.totalorder %s16, 0
      %p131 = por %p129, %p130
      %p132 = scmp.ne.s32.totalorder %s120, %s121
      %p133 = scmp.eq.s32.totalorder %s17, 1
      %p134 = por %p132, %p133
      %p136 = scmp.ne.s32.totalorder %s121, %s135
      %p137 = scmp.eq.s32.totalorder %s17, 0
      %p138 = por %p136, %p137
      %p139 = scmp.le.s32.totalorder 1, %s11
      %p140 = scmp.lt.s32.totalorder %s11, 3
      %p141 = pnand %p139, %p140
      %p142 = pneg %p141
      // Predicated region
      $region9: #{tpu_custom_call.1} parent=5 // pred_check
        _
      $region10: #{tpu_custom_call.1} parent=5 // pred_check_branch
        %144 = sbr.rel (%p141) target = $region12
      $region11: #{tpu_custom_call.1} parent=5 // pred_region
        %s145 = ssub.s32 %s11, 1
        // Predicated region
        $region13: #{tpu_custom_call.1} parent=11 // pred_check
          %p146 = pneg %p58
        $region14: #{tpu_custom_call.1} parent=11 // pred_check_branch
          %148 = sbr.rel (%p146) target = $region16
        $region15: #{tpu_custom_call.1} parent=11 // pred_region
          _
        $region16: #{tpu_custom_call.1} parent=11 // pred_fallthru
          _
      $region12: #{tpu_custom_call.1} parent=5 // pred_fallthru
        _
      %p149 = scmp.lt.s32.totalorder %s11, 2
      // Predicated region
      $region17: #{tpu_custom_call.1} parent=5 // pred_check
        %p150 = pneg %p149
      $region18: #{tpu_custom_call.1} parent=5 // pred_check_branch
        %152 = sbr.rel (%p150) target = $region20
      $region19: #{tpu_custom_call.1} parent=5 // pred_region
        // Predicated region
        $region21: #{tpu_custom_call.1} parent=19 // pred_check
          %p153 = pneg %p31
        $region22: #{tpu_custom_call.1} parent=19 // pred_check_branch
          %155 = sbr.rel (%p153) target = $region24
        $region23: #{tpu_custom_call.1} parent=19 // pred_region
          %s156 = smul.u32 16, %s11
          %p157 = scmp.lt.s32.totalorder %s156, 31
          %s158 = scalar_select %p157, %s156, 31
          %s159 = smul.addr %s158, 4
          %s160 = scalar_lea.vmem %s0, %s159
          %s161 = smul.u32 16, %s11
        $region24: #{tpu_custom_call.1} parent=19 // pred_fallthru
          _
        // Predicated region
        $region25: #{tpu_custom_call.1} parent=19 // pred_check
          %p162 = pneg %p78
        $region26: #{tpu_custom_call.1} parent=19 // pred_check_branch
          %164 = sbr.rel (%p162) target = $region28
        $region27: #{tpu_custom_call.1} parent=19 // pred_region
          %s165 = smul.u32 4, %s11
          %p166 = scmp.lt.s32.totalorder %s165, 7
          %s167 = scalar_select %p166, %s165, 7
          %s168 = smul.addr %s167, 2
          %s169 = smul.addr %s168, 8
          %s170 = scalar_lea.vmem %s2, %s169
          %s171 = smul.u32 4, %s11
        $region28: #{tpu_custom_call.1} parent=19 // pred_fallthru
          _
        // Predicated region
        $region29: #{tpu_custom_call.1} parent=19 // pred_check
          %p172 = pneg %p104
        $region30: #{tpu_custom_call.1} parent=19 // pred_check_branch
          %174 = sbr.rel (%p172) target = $region32
        $region31: #{tpu_custom_call.1} parent=19 // pred_region
          %s175 = smul.u32 16, %s11
          %p176 = scmp.lt.s32.totalorder %s175, 31
          %s177 = scalar_select %p176, %s175, 31
          %s178 = smul.addr %s177, 8
          %s179 = scalar_lea.vmem %s3, %s178
          %s180 = smul.u32 16, %s11
        $region32: #{tpu_custom_call.1} parent=19 // pred_fallthru
          _
      $region20: #{tpu_custom_call.1} parent=5 // pred_fallthru
        _
      %p181 = scmp.le.s32.totalorder 1, %s11
      %p182 = scmp.lt.s32.totalorder %s11, 3
      %p183 = pnand %p181, %p182
      %p184 = pneg %p183
      // Predicated region
      $region33: #{tpu_custom_call.1} parent=5 // pred_check
        _
      $region34: #{tpu_custom_call.1} parent=5 // pred_check_branch
        %186 = sbr.rel (%p183) target = $region36
      $region35: #{tpu_custom_call.1} parent=5 // pred_region
        %s187 = ssub.s32 %s11, 1
        %s188 = smul.u32 16, %s16
        %p189 = scmp.lt.s32.totalorder %s188, 31
        %s190 = scalar_select %p189, %s188, 31
        %s191 = smul.addr %s190, 4
        %s192 = scalar_lea.vmem %s0, %s191
        %p193 = pneg %p37
        %p194 = pneg %p34
        %p195 = pneg %p58
        %p196 = pneg %p55
        %s197 = smul.u32 4, %s16
        %p198 = scmp.lt.s32.totalorder %s197, 7
        %s199 = scalar_select %p198, %s197, 7
        %s200 = smul.addr %s199, 2
        %s201 = smul.addr %s200, 8
        %s202 = scalar_lea.vmem %s2, %s201
        %p203 = pneg %p84
        %p204 = pneg %p81
        %s205 = smul.u32 16, %s16
        %p206 = scmp.lt.s32.totalorder %s205, 31
        %s207 = scalar_select %p206, %s205, 31
        %s208 = smul.addr %s207, 8
        %s209 = scalar_lea.vmem %s3, %s208
        %p210 = pneg %p110
        %p211 = pneg %p107
        %p212 = pneg %p131
        %p213 = pneg %p128
        %s214 = smul.u32 16, %s16
        %p215 = scmp.lt.s32.totalorder %s214, 31
        %s216 = scalar_select %p215, %s214, 31
        %s217 = smul.addr %s216, 4
        %s218 = scalar_lea.vmem %s0, %s217
        %s219 = smul.u32 16, %s16
        %s220 = smul.u32 4, %s16
        %p221 = scmp.lt.s32.totalorder %s220, 7
        %s222 = scalar_select %p221, %s220, 7
        %s223 = smul.addr %s222, 2
        %s224 = smul.addr %s223, 8
        %s225 = scalar_lea.vmem %s2, %s224
        %s226 = smul.u32 4, %s16
        %s227 = smul.u32 16, %s16
        %p228 = scmp.lt.s32.totalorder %s227, 31
        %s229 = scalar_select %p228, %s227, 31
        %s230 = smul.addr %s229, 8
        %s231 = scalar_lea.vmem %s3, %s230
        %s232 = smul.u32 16, %s16
        %p236 = scmp.eq.s32.totalorder %s16, 0
        // Predicated region
        $region37: #{tpu_custom_call.1} parent=35 // pred_check
          %p237 = pneg %p236
        $region38: #{tpu_custom_call.1} parent=35 // pred_check_branch
          %239 = sbr.rel (%p237) target = $region40
        $region39: #{tpu_custom_call.1} parent=35 // pred_region
          %s240 = scalar_lea.smem [#allocation2], 0
          %241 = sst [smem:[%s240]] 0.0
          %s242 = scalar_lea.smem [#allocation2], 1
          %243 = sst [smem:[%s242]] 0.0
        $region40: #{tpu_custom_call.1} parent=35 // pred_fallthru
          _
        %v244 = vld [vmem:[%s218] sm:$0xf]
        %v245 = vld [vmem:[%s218 + $0x4] sm:$0xf]
        %v246 = vld [vmem:[%s218 + $0x8] sm:$0xf]
        %v247 = vld [vmem:[%s218 + $0xc] sm:$0xf]
        %v248 = vld [vmem:[%s218 + $0x10] sm:$0xf]
        %v249 = vld [vmem:[%s218 + $0x14] sm:$0xf]
        %v250 = vld [vmem:[%s218 + $0x18] sm:$0xf]
        %v251 = vld [vmem:[%s218 + $0x1c] sm:$0xf]
        %v252 = vld [vmem:[%s218 + $0x20] sm:$0xf]
        %v253 = vld [vmem:[%s218 + $0x24] sm:$0xf]
        %v254 = vld [vmem:[%s218 + $0x28] sm:$0xf]
        %v255 = vld [vmem:[%s218 + $0x2c] sm:$0xf]
        %v256 = vld [vmem:[%s218 + $0x30] sm:$0xf]
        %v257 = vld [vmem:[%s218 + $0x34] sm:$0xf]
        %v258 = vld [vmem:[%s218 + $0x38] sm:$0xf]
        %v259 = vld [vmem:[%s218 + $0x3c] sm:$0xf]
        %v260 = vld [vmem:[%s1] sm:$0xf]
        %v261 = vld [vmem:[%s1 + $0x4] sm:$0xf]
        %v262 = vld [vmem:[%s1 + $0x8] sm:$0xf]
        %v263 = vld [vmem:[%s1 + $0xc] sm:$0xf]
        %v264 = vld [vmem:[%s1 + $0x10] sm:$0xf]
        %v265 = vld [vmem:[%s1 + $0x14] sm:$0xf]
        %v266 = vld [vmem:[%s1 + $0x18] sm:$0xf]
        %v267 = vld [vmem:[%s1 + $0x1c] sm:$0xf]
        %v268 = vld [vmem:[%s1 + $0x20] sm:$0xf]
        %v269 = vld [vmem:[%s1 + $0x24] sm:$0xf]
        %v270 = vld [vmem:[%s1 + $0x28] sm:$0xf]
        %v271 = vld [vmem:[%s1 + $0x2c] sm:$0xf]
        %v272 = vld [vmem:[%s1 + $0x30] sm:$0xf]
        %v273 = vld [vmem:[%s1 + $0x34] sm:$0xf]
        %v274 = vld [vmem:[%s1 + $0x38] sm:$0xf]
        %v275 = vld [vmem:[%s1 + $0x3c] sm:$0xf]
        %v276 = vld [vmem:[%s1 + $0x40] sm:$0xf]
        %v277 = vld [vmem:[%s1 + $0x44] sm:$0xf]
        %v278 = vld [vmem:[%s1 + $0x48] sm:$0xf]
        %v279 = vld [vmem:[%s1 + $0x4c] sm:$0xf]
        %v280 = vld [vmem:[%s1 + $0x50] sm:$0xf]
        %v281 = vld [vmem:[%s1 + $0x54] sm:$0xf]
        %v282 = vld [vmem:[%s1 + $0x58] sm:$0xf]
        %v283 = vld [vmem:[%s1 + $0x5c] sm:$0xf]
        %v284 = vld [vmem:[%s1 + $0x60] sm:$0xf]
        %v285 = vld [vmem:[%s1 + $0x64] sm:$0xf]
        %v286 = vld [vmem:[%s1 + $0x68] sm:$0xf]
        %v287 = vld [vmem:[%s1 + $0x6c] sm:$0xf]
        %v288 = vld [vmem:[%s1 + $0x70] sm:$0xf]
        %v289 = vld [vmem:[%s1 + $0x74] sm:$0xf]
        %v290 = vld [vmem:[%s1 + $0x78] sm:$0xf]
        %v291 = vld [vmem:[%s1 + $0x7c] sm:$0xf]
        %v308 = vunpack.c.l.b16 %v244
        %v309 = vunpack.c.l.b16 %v245
        %v310 = vunpack.c.l.b16 %v246
        %v311 = vunpack.c.l.b16 %v247
        %v312 = vunpack.c.l.b16 %v248
        %v313 = vunpack.c.l.b16 %v249
        %v314 = vunpack.c.l.b16 %v250
        %v315 = vunpack.c.l.b16 %v251
        %v316 = vunpack.c.l.b16 %v252
        %v317 = vunpack.c.l.b16 %v253
        %v318 = vunpack.c.l.b16 %v254
        %v319 = vunpack.c.l.b16 %v255
        %v320 = vunpack.c.l.b16 %v256
        %v321 = vunpack.c.l.b16 %v257
        %v322 = vunpack.c.l.b16 %v258
        %v323 = vunpack.c.l.b16 %v259
        %v324 = vpack.c.b16 %v309, %v308
        %v325 = vpack.c.b16 %v311, %v310
        %v326 = vpack.c.b16 %v313, %v312
        %v327 = vpack.c.b16 %v315, %v314
        %v328 = vpack.c.b16 %v317, %v316
        %v329 = vpack.c.b16 %v319, %v318
        %v330 = vpack.c.b16 %v321, %v320
        %v331 = vpack.c.b16 %v323, %v322
        %v364 = vunpack.c.l.b16 %v260
        %v365 = vunpack.c.l.b16 %v261
        %v366 = vunpack.c.l.b16 %v262
        %v367 = vunpack.c.l.b16 %v263
        %v368 = vunpack.c.l.b16 %v264
        %v369 = vunpack.c.l.b16 %v265
        %v370 = vunpack.c.l.b16 %v266
        %v371 = vunpack.c.l.b16 %v267
        %v372 = vunpack.c.l.b16 %v268
        %v373 = vunpack.c.l.b16 %v269
        %v374 = vunpack.c.l.b16 %v270
        %v375 = vunpack.c.l.b16 %v271
        %v376 = vunpack.c.l.b16 %v272
        %v377 = vunpack.c.l.b16 %v273
        %v378 = vunpack.c.l.b16 %v274
        %v379 = vunpack.c.l.b16 %v275
        %v380 = vunpack.c.l.b16 %v276
        %v381 = vunpack.c.l.b16 %v277
        %v382 = vunpack.c.l.b16 %v278
        %v383 = vunpack.c.l.b16 %v279
        %v384 = vunpack.c.l.b16 %v280
        %v385 = vunpack.c.l.b16 %v281
        %v386 = vunpack.c.l.b16 %v282
        %v387 = vunpack.c.l.b16 %v283
        %v388 = vunpack.c.l.b16 %v284
        %v389 = vunpack.c.l.b16 %v285
        %v390 = vunpack.c.l.b16 %v286
        %v391 = vunpack.c.l.b16 %v287
        %v392 = vunpack.c.l.b16 %v288
        %v393 = vunpack.c.l.b16 %v289
        %v394 = vunpack.c.l.b16 %v290
        %v395 = vunpack.c.l.b16 %v291
        %v396 = vpack.c.b16 %v365, %v364
        %v397 = vpack.c.b16 %v367, %v366
        %v398 = vpack.c.b16 %v369, %v368
        %v399 = vpack.c.b16 %v371, %v370
        %v400 = vpack.c.b16 %v373, %v372
        %v401 = vpack.c.b16 %v375, %v374
        %v402 = vpack.c.b16 %v377, %v376
        %v403 = vpack.c.b16 %v379, %v378
        %v404 = vpack.c.b16 %v381, %v380
        %v405 = vpack.c.b16 %v383, %v382
        %v406 = vpack.c.b16 %v385, %v384
        %v407 = vpack.c.b16 %v387, %v386
        %v408 = vpack.c.b16 %v389, %v388
        %v409 = vpack.c.b16 %v391, %v390
        %v410 = vpack.c.b16 %v393, %v392
        %v411 = vpack.c.b16 %v395, %v394
        %vm412 = vcmask 261120
        %v414 = vsel %vm412, %v324, 0
        %v417 = vsel %vm412, %v325, 0
        %v420 = vsel %vm412, %v326, 0
        %v423 = vsel %vm412, %v327, 0
        %v426 = vsel %vm412, %v328, 0
        %v429 = vsel %vm412, %v329, 0
        %v432 = vsel %vm412, %v330, 0
        %v435 = vsel %vm412, %v331, 0
        %v438 = vsel %vm412, %v396, 0
        %v441 = vsel %vm412, %v397, 0
        %v444 = vsel %vm412, %v398, 0
        %v447 = vsel %vm412, %v399, 0
        %v450 = vsel %vm412, %v400, 0
        %v453 = vsel %vm412, %v401, 0
        %v456 = vsel %vm412, %v402, 0
        %v459 = vsel %vm412, %v403, 0
        %v462 = vsel %vm412, %v404, 0
        %v465 = vsel %vm412, %v405, 0
        %v468 = vsel %vm412, %v406, 0
        %v471 = vsel %vm412, %v407, 0
        %v474 = vsel %vm412, %v408, 0
        %v477 = vsel %vm412, %v409, 0
        %v480 = vsel %vm412, %v410, 0
        %v483 = vsel %vm412, %v411, 0
        %485 = vmatprep.subr.bf16.mxu0 0
        %486 = vmatpush1.bf16.xpose.msra.mxu0 %v438
        %487 = vmatprep.subr.bf16.mxu0 0
        %488 = vmatpush1.bf16.xpose.msra.mxu0 %v441
        %489 = vmatprep.subr.bf16.mxu0 0
        %490 = vmatpush1.bf16.xpose.msra.mxu0 %v444
        %491 = vmatprep.subr.bf16.mxu0 0
        %492 = vmatpush1.bf16.xpose.msra.mxu0 %v447
        %493 = vmatprep.subr.bf16.mxu0 0
        %494 = vmatpush1.bf16.xpose.msra.mxu0 %v450
        %495 = vmatprep.subr.bf16.mxu0 0
        %496 = vmatpush1.bf16.xpose.msra.mxu0 %v453
        %497 = vmatprep.subr.bf16.mxu0 0
        %498 = vmatpush1.bf16.xpose.msra.mxu0 %v456
        %499 = vmatprep.subr.bf16.mxu0 0
        %500 = vmatpush1.bf16.xpose.msra.mxu0 %v459
        %501 = vmatprep.subr.bf16.mxu0 0
        %502 = vmatpush1.bf16.xpose.msra.mxu0 %v462
        %503 = vmatprep.subr.bf16.mxu0 0
        %504 = vmatpush1.bf16.xpose.msra.mxu0 %v465
        %505 = vmatprep.subr.bf16.mxu0 0
        %506 = vmatpush1.bf16.xpose.msra.mxu0 %v468
        %507 = vmatprep.subr.bf16.mxu0 0
        %508 = vmatpush1.bf16.xpose.msra.mxu0 %v471
        %509 = vmatprep.subr.bf16.mxu0 0
        %510 = vmatpush1.bf16.xpose.msra.mxu0 %v474
        %511 = vmatprep.subr.bf16.mxu0 0
        %512 = vmatpush1.bf16.xpose.msra.mxu0 %v477
        %513 = vmatprep.subr.bf16.mxu0 0
        %514 = vmatpush1.bf16.xpose.msra.mxu0 %v480
        %515 = vmatprep.subr.bf16.mxu0 0
        %516 = vmatpush1.bf16.xpose.msra.mxu0 %v483
        %517 = vmatprep.mubr.bf16.mxu0 0
        %518 = vmatmul.mubr.bf16.gmra.mrb[0].mxu0 %v414
        %v519 = vpop.f32.mrb[0].mxu0
        %v520 = vadd.f32 0.0, %v519
        %v521 = vpop.f32.mrb[0].mxu0
        %v522 = vadd.f32 0.0, %v521
        %v523 = vpop.f32.mrb[0].mxu0
        %v524 = vadd.f32 0.0, %v523
        %v525 = vpop.f32.mrb[0].mxu0
        %v526 = vadd.f32 0.0, %v525
        %527 = vmatprep.mubr.bf16.mxu0 0
        %528 = vmatmul.mubr.bf16.gmra.mrb[0].mxu0 %v417
        %v529 = vpop.f32.mrb[0].mxu0
        %v530 = vadd.f32 0.0, %v529
        %v531 = vpop.f32.mrb[0].mxu0
        %v532 = vadd.f32 0.0, %v531
        %v533 = vpop.f32.mrb[0].mxu0
        %v534 = vadd.f32 0.0, %v533
        %v535 = vpop.f32.mrb[0].mxu0
        %v536 = vadd.f32 0.0, %v535
        %537 = vmatprep.mubr.bf16.mxu0 0
        %538 = vmatmul.mubr.bf16.gmra.mrb[0].mxu0 %v420
        %v539 = vpop.f32.mrb[0].mxu0
        %v540 = vadd.f32 0.0, %v539
        %v541 = vpop.f32.mrb[0].mxu0
        %v542 = vadd.f32 0.0, %v541
        %v543 = vpop.f32.mrb[0].mxu0
        %v544 = vadd.f32 0.0, %v543
        %v545 = vpop.f32.mrb[0].mxu0
        %v546 = vadd.f32 0.0, %v545
        %547 = vmatprep.mubr.bf16.mxu0 0
        %548 = vmatmul.mubr.bf16.gmra.mrb[0].mxu0 %v423
        %v549 = vpop.f32.mrb[0].mxu0
        %v550 = vadd.f32 0.0, %v549
        %v551 = vpop.f32.mrb[0].mxu0
        %v552 = vadd.f32 0.0, %v551
        %v553 = vpop.f32.mrb[0].mxu0
        %v554 = vadd.f32 0.0, %v553
        %v555 = vpop.f32.mrb[0].mxu0
        %v556 = vadd.f32 0.0, %v555
        %557 = vmatprep.mubr.bf16.mxu0 0
        %558 = vmatmul.mubr.bf16.gmra.mrb[0].mxu0 %v426
        %v559 = vpop.f32.mrb[0].mxu0
        %v560 = vadd.f32 0.0, %v559
        %v561 = vpop.f32.mrb[0].mxu0
        %v562 = vadd.f32 0.0, %v561
        %v563 = vpop.f32.mrb[0].mxu0
        %v564 = vadd.f32 0.0, %v563
        %v565 = vpop.f32.mrb[0].mxu0
        %v566 = vadd.f32 0.0, %v565
        %567 = vmatprep.mubr.bf16.mxu0 0
        %568 = vmatmul.mubr.bf16.gmra.mrb[0].mxu0 %v429
        %v569 = vpop.f32.mrb[0].mxu0
        %v570 = vadd.f32 0.0, %v569
        %v571 = vpop.f32.mrb[0].mxu0
        %v572 = vadd.f32 0.0, %v571
        %v573 = vpop.f32.mrb[0].mxu0
        %v574 = vadd.f32 0.0, %v573
        %v575 = vpop.f32.mrb[0].mxu0
        %v576 = vadd.f32 0.0, %v575
        %577 = vmatprep.mubr.bf16.mxu0 0
        %578 = vmatmul.mubr.bf16.gmra.mrb[0].mxu0 %v432
        %v579 = vpop.f32.mrb[0].mxu0
        %v580 = vadd.f32 0.0, %v579
        %v581 = vpop.f32.mrb[0].mxu0
        %v582 = vadd.f32 0.0, %v581
        %v583 = vpop.f32.mrb[0].mxu0
        %v584 = vadd.f32 0.0, %v583
        %v585 = vpop.f32.mrb[0].mxu0
        %v586 = vadd.f32 0.0, %v585
        %587 = vmatprep.mubr.bf16.mxu0 0
        %588 = vmatmul.mubr.bf16.gmra.mrb[0].mxu0 %v435
        %v589 = vpop.f32.mrb[0].mxu0
        %v590 = vadd.f32 0.0, %v589
        %v591 = vpop.f32.mrb[0].mxu0
        %v592 = vadd.f32 0.0, %v591
        %v593 = vpop.f32.mrb[0].mxu0
        %v594 = vadd.f32 0.0, %v593
        %v595 = vpop.f32.mrb[0].mxu0
        %v596 = vadd.f32 0.0, %v595
        %597 = vdwg.mxu0
        %v598 = vand.u32 2147483647, %v520
        %v599 = vand.u32 2147483647, %v522
        %v600 = vand.u32 2147483647, %v524
        %v601 = vand.u32 2147483647, %v526
        %v602 = vand.u32 2147483647, %v530
        %v603 = vand.u32 2147483647, %v532
        %v604 = vand.u32 2147483647, %v534
        %v605 = vand.u32 2147483647, %v536
        %v606 = vand.u32 2147483647, %v540
        %v607 = vand.u32 2147483647, %v542
        %v608 = vand.u32 2147483647, %v544
        %v609 = vand.u32 2147483647, %v546
        %v610 = vand.u32 2147483647, %v550
        %v611 = vand.u32 2147483647, %v552
        %v612 = vand.u32 2147483647, %v554
        %v613 = vand.u32 2147483647, %v556
        %v614 = vand.u32 2147483647, %v560
        %v615 = vand.u32 2147483647, %v562
        %v616 = vand.u32 2147483647, %v564
        %v617 = vand.u32 2147483647, %v566
        %v618 = vand.u32 2147483647, %v570
        %v619 = vand.u32 2147483647, %v572
        %v620 = vand.u32 2147483647, %v574
        %v621 = vand.u32 2147483647, %v576
        %v622 = vand.u32 2147483647, %v580
        %v623 = vand.u32 2147483647, %v582
        %v624 = vand.u32 2147483647, %v584
        %v625 = vand.u32 2147483647, %v586
        %v626 = vand.u32 2147483647, %v590
        %v627 = vand.u32 2147483647, %v592
        %v628 = vand.u32 2147483647, %v594
        %v629 = vand.u32 2147483647, %v596
        %v630 = vmul.f32 %v598, 1.442695
        %v631 = vpow.pop %v630
        %v632 = vmul.f32 %v599, 1.442695
        %v633 = vpow.pop %v632
        %v634 = vmul.f32 %v600, 1.442695
        %v635 = vpow.pop %v634
        %v636 = vmul.f32 %v601, 1.442695
        %v637 = vpow.pop %v636
        %v638 = vmul.f32 %v602, 1.442695
        %v639 = vpow.pop %v638
        %v640 = vmul.f32 %v603, 1.442695
        %v641 = vpow.pop %v640
        %v642 = vmul.f32 %v604, 1.442695
        %v643 = vpow.pop %v642
        %v644 = vmul.f32 %v605, 1.442695
        %v645 = vpow.pop %v644
        %v646 = vmul.f32 %v606, 1.442695
        %v647 = vpow.pop %v646
        %v648 = vmul.f32 %v607, 1.442695
        %v649 = vpow.pop %v648
        %v650 = vmul.f32 %v608, 1.442695
        %v651 = vpow.pop %v650
        %v652 = vmul.f32 %v609, 1.442695
        %v653 = vpow.pop %v652
        %v654 = vmul.f32 %v610, 1.442695
        %v655 = vpow.pop %v654
        %v656 = vmul.f32 %v611, 1.442695
        %v657 = vpow.pop %v656
        %v658 = vmul.f32 %v612, 1.442695
        %v659 = vpow.pop %v658
        %v660 = vmul.f32 %v613, 1.442695
        %v661 = vpow.pop %v660
        %v662 = vmul.f32 %v614, 1.442695
        %v663 = vpow.pop %v662
        %v664 = vmul.f32 %v615, 1.442695
        %v665 = vpow.pop %v664
        %v666 = vmul.f32 %v616, 1.442695
        %v667 = vpow.pop %v666
        %v668 = vmul.f32 %v617, 1.442695
        %v669 = vpow.pop %v668
        %v670 = vmul.f32 %v618, 1.442695
        %v671 = vpow.pop %v670
        %v672 = vmul.f32 %v619, 1.442695
        %v673 = vpow.pop %v672
        %v674 = vmul.f32 %v620, 1.442695
        %v675 = vpow.pop %v674
        %v676 = vmul.f32 %v621, 1.442695
        %v677 = vpow.pop %v676
        %v678 = vmul.f32 %v622, 1.442695
        %v679 = vpow.pop %v678
        %v680 = vmul.f32 %v623, 1.442695
        %v681 = vpow.pop %v680
        %v682 = vmul.f32 %v624, 1.442695
        %v683 = vpow.pop %v682
        %v684 = vmul.f32 %v625, 1.442695
        %v685 = vpow.pop %v684
        %v686 = vmul.f32 %v626, 1.442695
        %v687 = vpow.pop %v686
        %v688 = vmul.f32 %v627, 1.442695
        %v689 = vpow.pop %v688
        %v690 = vmul.f32 %v628, 1.442695
        %v691 = vpow.pop %v690
        %v692 = vmul.f32 %v629, 1.442695
        %v693 = vpow.pop %v692
        %v694 = vld [vmem:[%s225] sm:$0xff]
        %v695 = vld [vmem:[%s225 + $0x8] sm:$0xff]
        %v696 = vld [vmem:[%s225 + $0x10] sm:$0xff]
        %v697 = vld [vmem:[%s225 + $0x18] sm:$0xff]
        %v698 = vld [vmem:[%s225 + $0x20] sm:$0xff]
        %v699 = vld [vmem:[%s225 + $0x28] sm:$0xff]
        %v700 = vld [vmem:[%s225 + $0x30] sm:$0xff]
        %v701 = vld [vmem:[%s225 + $0x38] sm:$0xff]
        %vm702 = vnez %v694
        %vm703 = vnez %v695
        %vm704 = vnez %v696
        %vm705 = vnez %v697
        %vm706 = vnez %v698
        %vm707 = vnez %v699
        %vm708 = vnez %v700
        %vm709 = vnez %v701
        %v710 = vsel %vm702, 16843009, 0
        %v711 = vsel %vm703, 16843009, 0
        %v712 = vsel %vm704, 16843009, 0
        %v713 = vsel %vm705, 16843009, 0
        %v714 = vsel %vm706, 16843009, 0
        %v715 = vsel %vm707, 16843009, 0
        %v716 = vsel %vm708, 16843009, 0
        %v717 = vsel %vm709, 16843009, 0
        %v718 = vunpack.c.0.s8 %v710
        %v719 = vunpack.c.0.s8 %v711
        %v720 = vunpack.c.1.s8 %v710
        %v721 = vunpack.c.1.s8 %v711
        %v722 = vunpack.c.2.s8 %v710
        %v723 = vunpack.c.2.s8 %v711
        %v724 = vunpack.c.3.s8 %v710
        %v725 = vunpack.c.3.s8 %v711
        %v726 = vunpack.c.0.s8 %v712
        %v727 = vunpack.c.0.s8 %v713
        %v728 = vunpack.c.1.s8 %v712
        %v729 = vunpack.c.1.s8 %v713
        %v730 = vunpack.c.2.s8 %v712
        %v731 = vunpack.c.2.s8 %v713
        %v732 = vunpack.c.3.s8 %v712
        %v733 = vunpack.c.3.s8 %v713
        %v734 = vunpack.c.0.s8 %v714
        %v735 = vunpack.c.0.s8 %v715
        %v736 = vunpack.c.1.s8 %v714
        %v737 = vunpack.c.1.s8 %v715
        %v738 = vunpack.c.2.s8 %v714
        %v739 = vunpack.c.2.s8 %v715
        %v740 = vunpack.c.3.s8 %v714
        %v741 = vunpack.c.3.s8 %v715
        %v742 = vunpack.c.0.s8 %v716
        %v743 = vunpack.c.0.s8 %v717
        %v744 = vunpack.c.1.s8 %v716
        %v745 = vunpack.c.1.s8 %v717
        %v746 = vunpack.c.2.s8 %v716
        %v747 = vunpack.c.2.s8 %v717
        %v748 = vunpack.c.3.s8 %v716
        %v749 = vunpack.c.3.s8 %v717
        %v750 = vpack.c.b16 %v719, %v718
        %v751 = vpack.c.b8 %v750, %v750
        %v752 = vpack.c.b16 %v721, %v720
        %v753 = vpack.c.b8 %v752, %v752
        %v754 = vpack.c.b16 %v723, %v722
        %v755 = vpack.c.b8 %v754, %v754
        %v756 = vpack.c.b16 %v725, %v724
        %v757 = vpack.c.b8 %v756, %v756
        %v758 = vpack.c.b16 %v727, %v726
        %v759 = vpack.c.b8 %v758, %v758
        %v760 = vpack.c.b16 %v729, %v728
        %v761 = vpack.c.b8 %v760, %v760
        %v762 = vpack.c.b16 %v731, %v730
        %v763 = vpack.c.b8 %v762, %v762
        %v764 = vpack.c.b16 %v733, %v732
        %v765 = vpack.c.b8 %v764, %v764
        %v766 = vpack.c.b16 %v735, %v734
        %v767 = vpack.c.b8 %v766, %v766
        %v768 = vpack.c.b16 %v737, %v736
        %v769 = vpack.c.b8 %v768, %v768
        %v770 = vpack.c.b16 %v739, %v738
        %v771 = vpack.c.b8 %v770, %v770
        %v772 = vpack.c.b16 %v741, %v740
        %v773 = vpack.c.b8 %v772, %v772
        %v774 = vpack.c.b16 %v743, %v742
        %v775 = vpack.c.b8 %v774, %v774
        %v776 = vpack.c.b16 %v745, %v744
        %v777 = vpack.c.b8 %v776, %v776
        %v778 = vpack.c.b16 %v747, %v746
        %v779 = vpack.c.b8 %v778, %v778
        %v780 = vpack.c.b16 %v749, %v748
        %v781 = vpack.c.b8 %v780, %v780
        %vm782 = vnez %v751
        %vm783 = vnez %v753
        %vm784 = vnez %v755
        %vm785 = vnez %v757
        %vm786 = vnez %v759
        %vm787 = vnez %v761
        %vm788 = vnez %v763
        %vm789 = vnez %v765
        %vm790 = vnez %v767
        %vm791 = vnez %v769
        %vm792 = vnez %v771
        %vm793 = vnez %v773
        %vm794 = vnez %v775
        %vm795 = vnez %v777
        %vm796 = vnez %v779
        %vm797 = vnez %v781
        %v798 = vsel %vm782, 16843009, 0
        %v799 = vsel %vm783, 16843009, 0
        %v800 = vsel %vm784, 16843009, 0
        %v801 = vsel %vm785, 16843009, 0
        %v802 = vsel %vm786, 16843009, 0
        %v803 = vsel %vm787, 16843009, 0
        %v804 = vsel %vm788, 16843009, 0
        %v805 = vsel %vm789, 16843009, 0
        %v806 = vsel %vm790, 16843009, 0
        %v807 = vsel %vm791, 16843009, 0
        %v808 = vsel %vm792, 16843009, 0
        %v809 = vsel %vm793, 16843009, 0
        %v810 = vsel %vm794, 16843009, 0
        %v811 = vsel %vm795, 16843009, 0
        %v812 = vsel %vm796, 16843009, 0
        %v813 = vsel %vm797, 16843009, 0
        %v814 = vunpack.c.0.s8 %v798
        %v815 = vunpack.c.1.s8 %v798
        %v816 = vunpack.c.0.s8 %v799
        %v817 = vunpack.c.1.s8 %v799
        %v818 = vunpack.c.0.s8 %v800
        %v819 = vunpack.c.1.s8 %v800
        %v820 = vunpack.c.0.s8 %v801
        %v821 = vunpack.c.1.s8 %v801
        %v822 = vunpack.c.0.s8 %v802
        %v823 = vunpack.c.1.s8 %v802
        %v824 = vunpack.c.0.s8 %v803
        %v825 = vunpack.c.1.s8 %v803
        %v826 = vunpack.c.0.s8 %v804
        %v827 = vunpack.c.1.s8 %v804
        %v828 = vunpack.c.0.s8 %v805
        %v829 = vunpack.c.1.s8 %v805
        %v830 = vunpack.c.0.s8 %v806
        %v831 = vunpack.c.1.s8 %v806
        %v832 = vunpack.c.0.s8 %v807
        %v833 = vunpack.c.1.s8 %v807
        %v834 = vunpack.c.0.s8 %v808
        %v835 = vunpack.c.1.s8 %v808
        %v836 = vunpack.c.0.s8 %v809
        %v837 = vunpack.c.1.s8 %v809
        %v838 = vunpack.c.0.s8 %v810
        %v839 = vunpack.c.1.s8 %v810
        %v840 = vunpack.c.0.s8 %v811
        %v841 = vunpack.c.1.s8 %v811
        %v842 = vunpack.c.0.s8 %v812
        %v843 = vunpack.c.1.s8 %v812
        %v844 = vunpack.c.0.s8 %v813
        %v845 = vunpack.c.1.s8 %v813
        %vm846 = vcmp.ne.s32.totalorder %v814, 0
        %vm847 = vcmp.ne.s32.totalorder %v815, 0
        %vm848 = vcmp.ne.s32.totalorder %v816, 0
        %vm849 = vcmp.ne.s32.totalorder %v817, 0
        %vm850 = vcmp.ne.s32.totalorder %v818, 0
        %vm851 = vcmp.ne.s32.totalorder %v819, 0
        %vm852 = vcmp.ne.s32.totalorder %v820, 0
        %vm853 = vcmp.ne.s32.totalorder %v821, 0
        %vm854 = vcmp.ne.s32.totalorder %v822, 0
        %vm855 = vcmp.ne.s32.totalorder %v823, 0
        %vm856 = vcmp.ne.s32.totalorder %v824, 0
        %vm857 = vcmp.ne.s32.totalorder %v825, 0
        %vm858 = vcmp.ne.s32.totalorder %v826, 0
        %vm859 = vcmp.ne.s32.totalorder %v827, 0
        %vm860 = vcmp.ne.s32.totalorder %v828, 0
        %vm861 = vcmp.ne.s32.totalorder %v829, 0
        %vm862 = vcmp.ne.s32.totalorder %v830, 0
        %vm863 = vcmp.ne.s32.totalorder %v831, 0
        %vm864 = vcmp.ne.s32.totalorder %v832, 0
        %vm865 = vcmp.ne.s32.totalorder %v833, 0
        %vm866 = vcmp.ne.s32.totalorder %v834, 0
        %vm867 = vcmp.ne.s32.totalorder %v835, 0
        %vm868 = vcmp.ne.s32.totalorder %v836, 0
        %vm869 = vcmp.ne.s32.totalorder %v837, 0
        %vm870 = vcmp.ne.s32.totalorder %v838, 0
        %vm871 = vcmp.ne.s32.totalorder %v839, 0
        %vm872 = vcmp.ne.s32.totalorder %v840, 0
        %vm873 = vcmp.ne.s32.totalorder %v841, 0
        %vm874 = vcmp.ne.s32.totalorder %v842, 0
        %vm875 = vcmp.ne.s32.totalorder %v843, 0
        %vm876 = vcmp.ne.s32.totalorder %v844, 0
        %vm877 = vcmp.ne.s32.totalorder %v845, 0
        %v878 = vsel %vm846, %v631, 0.0
        %v879 = vsel %vm847, %v633, 0.0
        %v880 = vsel %vm848, %v635, 0.0
        %v881 = vsel %vm849, %v637, 0.0
        %v882 = vsel %vm850, %v639, 0.0
        %v883 = vsel %vm851, %v641, 0.0
        %v884 = vsel %vm852, %v643, 0.0
        %v885 = vsel %vm853, %v645, 0.0
        %v886 = vsel %vm854, %v647, 0.0
        %v887 = vsel %vm855, %v649, 0.0
        %v888 = vsel %vm856, %v651, 0.0
        %v889 = vsel %vm857, %v653, 0.0
        %v890 = vsel %vm858, %v655, 0.0
        %v891 = vsel %vm859, %v657, 0.0
        %v892 = vsel %vm860, %v659, 0.0
        %v893 = vsel %vm861, %v661, 0.0
        %v894 = vsel %vm862, %v663, 0.0
        %v895 = vsel %vm863, %v665, 0.0
        %v896 = vsel %vm864, %v667, 0.0
        %v897 = vsel %vm865, %v669, 0.0
        %v898 = vsel %vm866, %v671, 0.0
        %v899 = vsel %vm867, %v673, 0.0
        %v900 = vsel %vm868, %v675, 0.0
        %v901 = vsel %vm869, %v677, 0.0
        %v902 = vsel %vm870, %v679, 0.0
        %v903 = vsel %vm871, %v681, 0.0
        %v904 = vsel %vm872, %v683, 0.0
        %v905 = vsel %vm873, %v685, 0.0
        %v906 = vsel %vm874, %v687, 0.0
        %v907 = vsel %vm875, %v689, 0.0
        %v908 = vsel %vm876, %v691, 0.0
        %v909 = vsel %vm877, %v693, 0.0
        %v910 = vadd.f32 %v878, %v879
        %911 = vadd.xlane.f32.xlu0 %v910
        %v912 = vpop.xlane.xlu0 %911
        %v913 = vadd.f32 %v880, %v881
        %914 = vadd.xlane.f32.xlu0 %v913
        %v915 = vpop.xlane.xlu0 %914
        %v916 = vadd.f32 %v882, %v883
        %917 = vadd.xlane.f32.xlu0 %v916
        %v918 = vpop.xlane.xlu0 %917
        %v919 = vadd.f32 %v884, %v885
        %920 = vadd.xlane.f32.xlu0 %v919
        %v921 = vpop.xlane.xlu0 %920
        %v922 = vadd.f32 %v886, %v887
        %923 = vadd.xlane.f32.xlu0 %v922
        %v924 = vpop.xlane.xlu0 %923
        %v925 = vadd.f32 %v888, %v889
        %926 = vadd.xlane.f32.xlu0 %v925
        %v927 = vpop.xlane.xlu0 %926
        %v928 = vadd.f32 %v890, %v891
        %929 = vadd.xlane.f32.xlu0 %v928
        %v930 = vpop.xlane.xlu0 %929
        %v931 = vadd.f32 %v892, %v893
        %932 = vadd.xlane.f32.xlu0 %v931
        %v933 = vpop.xlane.xlu0 %932
        %v934 = vadd.f32 %v894, %v895
        %935 = vadd.xlane.f32.xlu0 %v934
        %v936 = vpop.xlane.xlu0 %935
        %v937 = vadd.f32 %v896, %v897
        %938 = vadd.xlane.f32.xlu0 %v937
        %v939 = vpop.xlane.xlu0 %938
        %v940 = vadd.f32 %v898, %v899
        %941 = vadd.xlane.f32.xlu0 %v940
        %v942 = vpop.xlane.xlu0 %941
        %v943 = vadd.f32 %v900, %v901
        %944 = vadd.xlane.f32.xlu0 %v943
        %v945 = vpop.xlane.xlu0 %944
        %v946 = vadd.f32 %v902, %v903
        %947 = vadd.xlane.f32.xlu0 %v946
        %v948 = vpop.xlane.xlu0 %947
        %v949 = vadd.f32 %v904, %v905
        %950 = vadd.xlane.f32.xlu0 %v949
        %v951 = vpop.xlane.xlu0 %950
        %v952 = vadd.f32 %v906, %v907
        %953 = vadd.xlane.f32.xlu0 %v952
        %v954 = vpop.xlane.xlu0 %953
        %v955 = vadd.f32 %v908, %v909
        %956 = vadd.xlane.f32.xlu0 %v955
        %v957 = vpop.xlane.xlu0 %956
        %v958 = vadd.f32 %v631, %v633
        %959 = vadd.xlane.f32.xlu0 %v958
        %v960 = vpop.xlane.xlu0 %959
        %v961 = vadd.f32 %v635, %v637
        %962 = vadd.xlane.f32.xlu0 %v961
        %v963 = vpop.xlane.xlu0 %962
        %v964 = vadd.f32 %v639, %v641
        %965 = vadd.xlane.f32.xlu0 %v964
        %v966 = vpop.xlane.xlu0 %965
        %v967 = vadd.f32 %v643, %v645
        %968 = vadd.xlane.f32.xlu0 %v967
        %v969 = vpop.xlane.xlu0 %968
        %v970 = vadd.f32 %v647, %v649
        %971 = vadd.xlane.f32.xlu0 %v970
        %v972 = vpop.xlane.xlu0 %971
        %v973 = vadd.f32 %v651, %v653
        %974 = vadd.xlane.f32.xlu0 %v973
        %v975 = vpop.xlane.xlu0 %974
        %v976 = vadd.f32 %v655, %v657
        %977 = vadd.xlane.f32.xlu0 %v976
        %v978 = vpop.xlane.xlu0 %977
        %v979 = vadd.f32 %v659, %v661
        %980 = vadd.xlane.f32.xlu0 %v979
        %v981 = vpop.xlane.xlu0 %980
        %v982 = vadd.f32 %v663, %v665
        %983 = vadd.xlane.f32.xlu0 %v982
        %v984 = vpop.xlane.xlu0 %983
        %v985 = vadd.f32 %v667, %v669
        %986 = vadd.xlane.f32.xlu0 %v985
        %v987 = vpop.xlane.xlu0 %986
        %v988 = vadd.f32 %v671, %v673
        %989 = vadd.xlane.f32.xlu0 %v988
        %v990 = vpop.xlane.xlu0 %989
        %v991 = vadd.f32 %v675, %v677
        %992 = vadd.xlane.f32.xlu0 %v991
        %v993 = vpop.xlane.xlu0 %992
        %v994 = vadd.f32 %v679, %v681
        %995 = vadd.xlane.f32.xlu0 %v994
        %v996 = vpop.xlane.xlu0 %995
        %v997 = vadd.f32 %v683, %v685
        %998 = vadd.xlane.f32.xlu0 %v997
        %v999 = vpop.xlane.xlu0 %998
        %v1000 = vadd.f32 %v687, %v689
        %1001 = vadd.xlane.f32.xlu0 %v1000
        %v1002 = vpop.xlane.xlu0 %1001
        %v1003 = vadd.f32 %v691, %v693
        %1004 = vadd.xlane.f32.xlu0 %v1003
        %v1005 = vpop.xlane.xlu0 %1004
        %v1006 = vrcp.pop %v960
        %v1007 = vmul.f32 %v912, %v1006
        %v1008 = vrcp.pop %v963
        %v1009 = vmul.f32 %v915, %v1008
        %v1010 = vrcp.pop %v966
        %v1011 = vmul.f32 %v918, %v1010
        %v1012 = vrcp.pop %v969
        %v1013 = vmul.f32 %v921, %v1012
        %v1014 = vrcp.pop %v972
        %v1015 = vmul.f32 %v924, %v1014
        %v1016 = vrcp.pop %v975
        %v1017 = vmul.f32 %v927, %v1016
        %v1018 = vrcp.pop %v978
        %v1019 = vmul.f32 %v930, %v1018
        %v1020 = vrcp.pop %v981
        %v1021 = vmul.f32 %v933, %v1020
        %v1022 = vrcp.pop %v984
        %v1023 = vmul.f32 %v936, %v1022
        %v1024 = vrcp.pop %v987
        %v1025 = vmul.f32 %v939, %v1024
        %v1026 = vrcp.pop %v990
        %v1027 = vmul.f32 %v942, %v1026
        %v1028 = vrcp.pop %v993
        %v1029 = vmul.f32 %v945, %v1028
        %v1030 = vrcp.pop %v996
        %v1031 = vmul.f32 %v948, %v1030
        %v1032 = vrcp.pop %v999
        %v1033 = vmul.f32 %v951, %v1032
        %v1034 = vrcp.pop %v1002
        %v1035 = vmul.f32 %v954, %v1034
        %v1036 = vrcp.pop %v1005
        %v1037 = vmul.f32 %v957, %v1036
        %v1038 = vadd.f32 %v1007, 1e-07
        %v1039 = vadd.f32 %v1009, 1e-07
        %v1040 = vadd.f32 %v1011, 1e-07
        %v1041 = vadd.f32 %v1013, 1e-07
        %v1042 = vadd.f32 %v1015, 1e-07
        %v1043 = vadd.f32 %v1017, 1e-07
        %v1044 = vadd.f32 %v1019, 1e-07
        %v1045 = vadd.f32 %v1021, 1e-07
        %v1046 = vadd.f32 %v1023, 1e-07
        %v1047 = vadd.f32 %v1025, 1e-07
        %v1048 = vadd.f32 %v1027, 1e-07
        %v1049 = vadd.f32 %v1029, 1e-07
        %v1050 = vadd.f32 %v1031, 1e-07
        %v1051 = vadd.f32 %v1033, 1e-07
        %v1052 = vadd.f32 %v1035, 1e-07
        %v1053 = vadd.f32 %v1037, 1e-07
        %v1054 = vlog2.pop %v1038
        %v1055 = vmul.f32 %v1054, 0.6931472
        %v1056 = vlog2.pop %v1039
        %v1057 = vmul.f32 %v1056, 0.6931472
        %v1058 = vlog2.pop %v1040
        %v1059 = vmul.f32 %v1058, 0.6931472
        %v1060 = vlog2.pop %v1041
        %v1061 = vmul.f32 %v1060, 0.6931472
        %v1062 = vlog2.pop %v1042
        %v1063 = vmul.f32 %v1062, 0.6931472
        %v1064 = vlog2.pop %v1043
        %v1065 = vmul.f32 %v1064, 0.6931472
        %v1066 = vlog2.pop %v1044
        %v1067 = vmul.f32 %v1066, 0.6931472
        %v1068 = vlog2.pop %v1045
        %v1069 = vmul.f32 %v1068, 0.6931472
        %v1070 = vlog2.pop %v1046
        %v1071 = vmul.f32 %v1070, 0.6931472
        %v1072 = vlog2.pop %v1047
        %v1073 = vmul.f32 %v1072, 0.6931472
        %v1074 = vlog2.pop %v1048
        %v1075 = vmul.f32 %v1074, 0.6931472
        %v1076 = vlog2.pop %v1049
        %v1077 = vmul.f32 %v1076, 0.6931472
        %v1078 = vlog2.pop %v1050
        %v1079 = vmul.f32 %v1078, 0.6931472
        %v1080 = vlog2.pop %v1051
        %v1081 = vmul.f32 %v1080, 0.6931472
        %v1082 = vlog2.pop %v1052
        %v1083 = vmul.f32 %v1082, 0.6931472
        %v1084 = vlog2.pop %v1053
        %v1085 = vmul.f32 %v1084, 0.6931472
        %s1086 = sld [smem:[#allocation2]]
        %v1087 = vld [vmem:[%s231] sm:$0xff]
        %v1088 = vld [vmem:[%s231 + $0x8] sm:$0xff]
        %v1089 = vld [vmem:[%s231 + $0x10] sm:$0xff]
        %v1090 = vld [vmem:[%s231 + $0x18] sm:$0xff]
        %v1091 = vld [vmem:[%s231 + $0x20] sm:$0xff]
        %v1092 = vld [vmem:[%s231 + $0x28] sm:$0xff]
        %v1093 = vld [vmem:[%s231 + $0x30] sm:$0xff]
        %v1094 = vld [vmem:[%s231 + $0x38] sm:$0xff]
        %v1095 = vld [vmem:[%s231 + $0x40] sm:$0xff]
        %v1096 = vld [vmem:[%s231 + $0x48] sm:$0xff]
        %v1097 = vld [vmem:[%s231 + $0x50] sm:$0xff]
        %v1098 = vld [vmem:[%s231 + $0x58] sm:$0xff]
        %v1099 = vld [vmem:[%s231 + $0x60] sm:$0xff]
        %v1100 = vld [vmem:[%s231 + $0x68] sm:$0xff]
        %v1101 = vld [vmem:[%s231 + $0x70] sm:$0xff]
        %v1102 = vld [vmem:[%s231 + $0x78] sm:$0xff]
        %v1103 = vmul.f32 %v1055, %v1087
        %v1104 = vmul.f32 %v1057, %v1088
        %v1105 = vmul.f32 %v1059, %v1089
        %v1106 = vmul.f32 %v1061, %v1090
        %v1107 = vmul.f32 %v1063, %v1091
        %v1108 = vmul.f32 %v1065, %v1092
        %v1109 = vmul.f32 %v1067, %v1093
        %v1110 = vmul.f32 %v1069, %v1094
        %v1111 = vmul.f32 %v1071, %v1095
        %v1112 = vmul.f32 %v1073, %v1096
        %v1113 = vmul.f32 %v1075, %v1097
        %v1114 = vmul.f32 %v1077, %v1098
        %v1115 = vmul.f32 %v1079, %v1099
        %v1116 = vmul.f32 %v1081, %v1100
        %v1117 = vmul.f32 %v1083, %v1101
        %v1118 = vmul.f32 %v1085, %v1102
        %vm1119 = vcmask 7168
        %v1120 = vsel %vm1119, %v1103, 0.0
        %v1121 = vsel %vm1119, %v1104, 0.0
        %v1122 = vadd.f32 %v1120, %v1121
        %v1123 = vsel %vm1119, %v1105, 0.0
        %v1124 = vadd.f32 %v1122, %v1123
        %v1125 = vsel %vm1119, %v1106, 0.0
        %v1126 = vadd.f32 %v1124, %v1125
        %v1127 = vsel %vm1119, %v1107, 0.0
        %v1128 = vadd.f32 %v1126, %v1127
        %v1129 = vsel %vm1119, %v1108, 0.0
        %v1130 = vadd.f32 %v1128, %v1129
        %v1131 = vsel %vm1119, %v1109, 0.0
        %v1132 = vadd.f32 %v1130, %v1131
        %v1133 = vsel %vm1119, %v1110, 0.0
        %v1134 = vadd.f32 %v1132, %v1133
        %v1135 = vsel %vm1119, %v1111, 0.0
        %v1136 = vadd.f32 %v1134, %v1135
        %v1137 = vsel %vm1119, %v1112, 0.0
        %v1138 = vadd.f32 %v1136, %v1137
        %v1139 = vsel %vm1119, %v1113, 0.0
        %v1140 = vadd.f32 %v1138, %v1139
        %v1141 = vsel %vm1119, %v1114, 0.0
        %v1142 = vadd.f32 %v1140, %v1141
        %v1143 = vsel %vm1119, %v1115, 0.0
        %v1144 = vadd.f32 %v1142, %v1143
        %v1145 = vsel %vm1119, %v1116, 0.0
        %v1146 = vadd.f32 %v1144, %v1145
        %v1147 = vsel %vm1119, %v1117, 0.0
        %v1148 = vadd.f32 %v1146, %v1147
        %v1149 = vsel %vm1119, %v1118, 0.0
        %v1150 = vadd.f32 %v1148, %v1149
        %1151 = vadd.xlane.f32.xlu0 %v1150
        %v1152 = vpop.xlane.xlu0 %1151
        %v1153 = vrot.slane %v1152, 4
        %v1154 = vadd.f32 %v1152, %v1153
        %v1155 = vrot.slane %v1154, 2
        %v1156 = vadd.f32 %v1154, %v1155
        %v1157 = vrot.slane %v1156, 1
        %v1158 = vadd.f32 %v1156, %v1157
        %s1159 = vtos %v1158
        %s1160 = sadd.f32 %s1086, %s1159
        %s1161 = scalar_lea.smem [#allocation2], 0
        %1162 = sst [smem:[%s1161]] %s1160
        %s1163 = smul.u32 %s16, 128
        %v1164 = vlaneseq
        %v1165 = vshrl.u32 %v1164, 7
        %v1166 = vadd.s32 %v1165, 8
        %v1167 = vadd.s32 %v1165, 16
        %v1168 = vadd.s32 %v1165, 24
        %v1169 = vadd.s32 %v1165, 32
        %v1170 = vadd.s32 %v1165, 40
        %v1171 = vadd.s32 %v1165, 48
        %v1172 = vadd.s32 %v1165, 56
        %v1173 = vadd.s32 %v1165, 64
        %v1174 = vadd.s32 %v1165, 72
        %v1175 = vadd.s32 %v1165, 80
        %v1176 = vadd.s32 %v1165, 88
        %v1177 = vadd.s32 %v1165, 96
        %v1178 = vadd.s32 %v1165, 104
        %v1179 = vadd.s32 %v1165, 112
        %v1180 = vadd.s32 %v1165, 120
        %v1181 = vstv %s1163
        %v1182 = vadd.s32 %v1181, %v1165
        %v1183 = vadd.s32 %v1181, %v1166
        %v1184 = vadd.s32 %v1181, %v1167
        %v1185 = vadd.s32 %v1181, %v1168
        %v1186 = vadd.s32 %v1181, %v1169
        %v1187 = vadd.s32 %v1181, %v1170
        %v1188 = vadd.s32 %v1181, %v1171
        %v1189 = vadd.s32 %v1181, %v1172
        %v1190 = vadd.s32 %v1181, %v1173
        %v1191 = vadd.s32 %v1181, %v1174
        %v1192 = vadd.s32 %v1181, %v1175
        %v1193 = vadd.s32 %v1181, %v1176
        %v1194 = vadd.s32 %v1181, %v1177
        %v1195 = vadd.s32 %v1181, %v1178
        %v1196 = vadd.s32 %v1181, %v1179
        %v1197 = vadd.s32 %v1181, %v1180
        %vm1198 = vcmp.lt.s32.totalorder %v1182, 256
        %vm1199 = vcmp.lt.s32.totalorder %v1183, 256
        %vm1200 = vcmp.lt.s32.totalorder %v1184, 256
        %vm1201 = vcmp.lt.s32.totalorder %v1185, 256
        %vm1202 = vcmp.lt.s32.totalorder %v1186, 256
        %vm1203 = vcmp.lt.s32.totalorder %v1187, 256
        %vm1204 = vcmp.lt.s32.totalorder %v1188, 256
        %vm1205 = vcmp.lt.s32.totalorder %v1189, 256
        %vm1206 = vcmp.lt.s32.totalorder %v1190, 256
        %vm1207 = vcmp.lt.s32.totalorder %v1191, 256
        %vm1208 = vcmp.lt.s32.totalorder %v1192, 256
        %vm1209 = vcmp.lt.s32.totalorder %v1193, 256
        %vm1210 = vcmp.lt.s32.totalorder %v1194, 256
        %vm1211 = vcmp.lt.s32.totalorder %v1195, 256
        %vm1212 = vcmp.lt.s32.totalorder %v1196, 256
        %vm1213 = vcmp.lt.s32.totalorder %v1197, 256
        %v1214 = vadd.f32 %v912, 0.1
        %v1215 = vadd.f32 %v915, 0.1
        %v1216 = vadd.f32 %v918, 0.1
        %v1217 = vadd.f32 %v921, 0.1
        %v1218 = vadd.f32 %v924, 0.1
        %v1219 = vadd.f32 %v927, 0.1
        %v1220 = vadd.f32 %v930, 0.1
        %v1221 = vadd.f32 %v933, 0.1
        %v1222 = vadd.f32 %v936, 0.1
        %v1223 = vadd.f32 %v939, 0.1
        %v1224 = vadd.f32 %v942, 0.1
        %v1225 = vadd.f32 %v945, 0.1
        %v1226 = vadd.f32 %v948, 0.1
        %v1227 = vadd.f32 %v951, 0.1
        %v1228 = vadd.f32 %v954, 0.1
        %v1229 = vadd.f32 %v957, 0.1
        %v1230 = vlog2.pop %v1214
        %v1231 = vmul.f32 %v1230, 0.6931472
        %v1232 = vlog2.pop %v1215
        %v1233 = vmul.f32 %v1232, 0.6931472
        %v1234 = vlog2.pop %v1216
        %v1235 = vmul.f32 %v1234, 0.6931472
        %v1236 = vlog2.pop %v1217
        %v1237 = vmul.f32 %v1236, 0.6931472
        %v1238 = vlog2.pop %v1218
        %v1239 = vmul.f32 %v1238, 0.6931472
        %v1240 = vlog2.pop %v1219
        %v1241 = vmul.f32 %v1240, 0.6931472
        %v1242 = vlog2.pop %v1220
        %v1243 = vmul.f32 %v1242, 0.6931472
        %v1244 = vlog2.pop %v1221
        %v1245 = vmul.f32 %v1244, 0.6931472
        %v1246 = vlog2.pop %v1222
        %v1247 = vmul.f32 %v1246, 0.6931472
        %v1248 = vlog2.pop %v1223
        %v1249 = vmul.f32 %v1248, 0.6931472
        %v1250 = vlog2.pop %v1224
        %v1251 = vmul.f32 %v1250, 0.6931472
        %v1252 = vlog2.pop %v1225
        %v1253 = vmul.f32 %v1252, 0.6931472
        %v1254 = vlog2.pop %v1226
        %v1255 = vmul.f32 %v1254, 0.6931472
        %v1256 = vlog2.pop %v1227
        %v1257 = vmul.f32 %v1256, 0.6931472
        %v1258 = vlog2.pop %v1228
        %v1259 = vmul.f32 %v1258, 0.6931472
        %v1260 = vlog2.pop %v1229
        %v1261 = vmul.f32 %v1260, 0.6931472
        %v1262 = vsel %vm1198, %v1231, 0.0
        %v1263 = vsel %vm1199, %v1233, 0.0
        %v1264 = vsel %vm1200, %v1235, 0.0
        %v1265 = vsel %vm1201, %v1237, 0.0
        %v1266 = vsel %vm1202, %v1239, 0.0
        %v1267 = vsel %vm1203, %v1241, 0.0
        %v1268 = vsel %vm1204, %v1243, 0.0
        %v1269 = vsel %vm1205, %v1245, 0.0
        %v1270 = vsel %vm1206, %v1247, 0.0
        %v1271 = vsel %vm1207, %v1249, 0.0
        %v1272 = vsel %vm1208, %v1251, 0.0
        %v1273 = vsel %vm1209, %v1253, 0.0
        %v1274 = vsel %vm1210, %v1255, 0.0
        %v1275 = vsel %vm1211, %v1257, 0.0
        %v1276 = vsel %vm1212, %v1259, 0.0
        %v1277 = vsel %vm1213, %v1261, 0.0
        %s1278 = sld [smem:[#allocation2 + $0x1]]
        %v1279 = vsel %vm1119, %v1262, 0.0
        %v1280 = vsel %vm1119, %v1263, 0.0
        %v1281 = vadd.f32 %v1279, %v1280
        %v1282 = vsel %vm1119, %v1264, 0.0
        %v1283 = vadd.f32 %v1281, %v1282
        %v1284 = vsel %vm1119, %v1265, 0.0
        %v1285 = vadd.f32 %v1283, %v1284
        %v1286 = vsel %vm1119, %v1266, 0.0
        %v1287 = vadd.f32 %v1285, %v1286
        %v1288 = vsel %vm1119, %v1267, 0.0
        %v1289 = vadd.f32 %v1287, %v1288
        %v1290 = vsel %vm1119, %v1268, 0.0
        %v1291 = vadd.f32 %v1289, %v1290
        %v1292 = vsel %vm1119, %v1269, 0.0
        %v1293 = vadd.f32 %v1291, %v1292
        %v1294 = vsel %vm1119, %v1270, 0.0
        %v1295 = vadd.f32 %v1293, %v1294
        %v1296 = vsel %vm1119, %v1271, 0.0
        %v1297 = vadd.f32 %v1295, %v1296
        %v1298 = vsel %vm1119, %v1272, 0.0
        %v1299 = vadd.f32 %v1297, %v1298
        %v1300 = vsel %vm1119, %v1273, 0.0
        %v1301 = vadd.f32 %v1299, %v1300
        %v1302 = vsel %vm1119, %v1274, 0.0
        %v1303 = vadd.f32 %v1301, %v1302
        %v1304 = vsel %vm1119, %v1275, 0.0
        %v1305 = vadd.f32 %v1303, %v1304
        %v1306 = vsel %vm1119, %v1276, 0.0
        %v1307 = vadd.f32 %v1305, %v1306
        %v1308 = vsel %vm1119, %v1277, 0.0
        %v1309 = vadd.f32 %v1307, %v1308
        %1310 = vadd.xlane.f32.xlu0 %v1309
        %v1311 = vpop.xlane.xlu0 %1310
        %v1312 = vrot.slane %v1311, 4
        %v1313 = vadd.f32 %v1311, %v1312
        %v1314 = vrot.slane %v1313, 2
        %v1315 = vadd.f32 %v1313, %v1314
        %v1316 = vrot.slane %v1315, 1
        %v1317 = vadd.f32 %v1315, %v1316
        %s1318 = vtos %v1317
        %s1319 = sadd.f32 %s1278, %s1318
        %s1320 = scalar_lea.smem [#allocation2], 1
        %1321 = sst [smem:[%s1320]] %s1319
        // Predicated region
        $region41: #{tpu_custom_call.1} parent=35 // pred_check
          %p1322 = pneg %p128
        $region42: #{tpu_custom_call.1} parent=35 // pred_check_branch
          %1324 = sbr.rel (%p1322) target = $region44
        $region43: #{tpu_custom_call.1} parent=35 // pred_region
          %s1326 = ssub.s32 16, 16
          %1327 = vsyncadd [#allocation3], %s1326
          %1330 = dma.smem_to_hbm [#allocation2], 16, %s4, [#allocation3]
        $region44: #{tpu_custom_call.1} parent=35 // pred_fallthru
          _
        // Predicated region
        $region45: #{tpu_custom_call.1} parent=35 // pred_check
          %p1331 = pneg %p128
        $region46: #{tpu_custom_call.1} parent=35 // pred_check_branch
          %1333 = sbr.rel (%p1331) target = $region48
        $region47: #{tpu_custom_call.1} parent=35 // pred_region
          %1334 = dma.done [#allocation3], 16
        $region48: #{tpu_custom_call.1} parent=35 // pred_fallthru
          _
        %1335 = sfence
      $region36: #{tpu_custom_call.1} parent=5 // pred_fallthru
        _
      %p1336 = scmp.le.s32.totalorder 2, %s11
      // Predicated region
      $region49: #{tpu_custom_call.1} parent=5 // pred_check
        %p1337 = pneg %p1336
      $region50: #{tpu_custom_call.1} parent=5 // pred_check_branch
        %1339 = sbr.rel (%p1337) target = $region52
      $region51: #{tpu_custom_call.1} parent=5 // pred_region
        %s1340 = ssub.s32 %s11, 2
      $region52: #{tpu_custom_call.1} parent=5 // pred_fallthru
        _
    $region6: #{tpu_custom_call.1} parent=1 // loop_footer
      %s15 = sadd.s32 1, %s11
    $region7: #{tpu_custom_call.1} parent=1 // loop_footer_branch
      %10 = sbr.rel target = $region3
    $region8: #{tpu_custom_call.1} parent=1 // loop_exit
      _
    %1341 = vsyncpa [#allocation3], 1
    %s1342 = scalar_lea.sflag [#allocation3], 1
    %1343 = vsyncpa %s1342, 1

</llo_original>
